<compile_context>
chip_gen: v7x
topology: tpu7x:2x2x1
jax: 0.10.0
libtpu: 0.0.40
codegen_flags: <defaults>
</compile_context>

<pallas_src>
import functools

import jax
import jax.numpy as jnp
from jax.experimental import pallas as pl
from jax.experimental.pallas import tpu as pltpu

NEG_SLOPE = 0.01               # torch.nn.LeakyReLU default
COMPUTE_DTYPE = jnp.bfloat16   # matmul operand dtype (f32 accumulation)


def _leaky_relu(x):
    return jnp.where(x > 0, x, NEG_SLOPE * x)


def _round_up(n, m):
    return ((n + m - 1) // m) * m


# ----------------------------------------------------------------------------
# Fused kernel: all causal blocks + max-pool + encoder/classifier linears
# ----------------------------------------------------------------------------
def make_fused_kernel(cfgs, *, K, T, P_MAX, C_MAX, HP, HW, B, num_class, cdtype):
    """cfgs: list of (c_in, c_out, dilation, has_downsample) per block."""
    TP = T + P_MAX
    LOUT = B * TP              # width of every layer output (all batches)
    LE = P_MAX + LOUT          # + leading zero guard so tap windows are in-bounds
    n_blocks = len(cfgs)

    def kernel(x_ref, wconv_ref, bconv_ref, whead_ref, bhead_ref, out_ref, slab):
        f32 = jnp.float32

        # ---- column mask: 1.0 on the T valid lanes of each batch segment ----
        col = jax.lax.broadcasted_iota(jnp.int32, (1, LOUT), 1)
        valid = col < 0                                    # all-False start
        for b in range(B):
            lo, hi = b * TP + P_MAX, (b + 1) * TP
            valid = jnp.logical_or(valid, jnp.logical_and(col >= lo, col < hi))
        mask = valid.astype(f32)                           # (1, LOUT)

        # Guard columns of the slab are zeroed once and never written again.
        slab[:, :P_MAX] = jnp.zeros((C_MAX, P_MAX), f32)

        bconv = bconv_ref[...]                             # (C_MAX, NB) f32

        def materialize(v):
            """(C_MAX, LOUT) value -> (C_MAX, LE) value with zero guard,
            via the persistent slab (its guard columns stay zero)."""
            slab[:, P_MAX:] = v
            return slab[...]

        def conv(x_full, w_base, b_idx, dil):
            """Dilated causal conv over ALL batches at once.
            x_full: (C_MAX, LE) f32 with guard + per-batch pad columns all zero.
            Returns (C_MAX, LOUT) f32 pre-activation (pad columns = garbage,
            masked by the caller)."""
            acc = None
            for k in range(K):
                s = (K - 1 - k) * dil                      # static lane shift <= P_MAX
                win = x_full[:, P_MAX - s:P_MAX - s + LOUT].astype(cdtype)
                d = jnp.dot(wconv_ref[w_base + k], win,
                            preferred_element_type=f32)
                acc = d if acc is None else acc + d
            return acc + bconv[:, b_idx:b_idx + 1]

        # ---- causal convolution blocks ----
        x_full = x_ref[...]                                # (C_MAX, LE) f32
        w_idx = 0
        b_idx = 0
        y = None
        for i, (c_in, c_out, dil, down) in enumerate(cfgs):
            h = _leaky_relu(conv(x_full, w_idx, b_idx, dil)) * mask
            w_idx += K
            b_idx += 1
            h_full = materialize(h)
            oc = _leaky_relu(conv(h_full, w_idx, b_idx, dil))
            w_idx += K
            b_idx += 1
            if down:                                       # 1x1 conv residual
                res = jnp.dot(wconv_ref[w_idx],
                              x_full[:, P_MAX:].astype(cdtype),
                              preferred_element_type=f32) + bconv[:, b_idx:b_idx + 1]
                w_idx += 1
                b_idx += 1
            else:                                          # identity residual
                res = x_full[:, P_MAX:]
            y = (oc + res) * mask                          # final=False: no extra relu
            if i + 1 < n_blocks:
                x_full = materialize(y)

        # ---- head: AdaptiveMaxPool1d(1) + squeeze(2) + Linear + [Linear,ReLU,Linear]
        bsel = jax.lax.broadcasted_iota(jnp.int32, (1, B), 1)
        pooled = jnp.zeros((C_MAX, B), f32)
        for b in range(B):
            seg = y[:, b * TP + P_MAX: b * TP + P_MAX + T]      # valid columns only
            m_b = jnp.max(seg, axis=1, keepdims=True)           # (C_MAX, 1)
            pooled = pooled + m_b * (bsel == b).astype(f32)     # place into column b

        bhead = bhead_ref[...]                             # (HP, 3) f32
        z = jnp.dot(whead_ref[0][:, :C_MAX], pooled.astype(cdtype),
                    preferred_element_type=f32) + bhead[:, 0:1]
        hc = jnp.dot(whead_ref[1][:, :HP], z.astype(cdtype),
                     preferred_element_type=f32) + bhead[:, 1:2]
        hc = jnp.maximum(hc, 0.0)                          # ReLU (dropout = identity, eval)
        logits = jnp.dot(whead_ref[2][:, :HP], hc.astype(cdtype),
                         preferred_element_type=f32) + bhead[:, 2:3]
        out_ref[...] = logits[:num_class, :].astype(out_ref.dtype)

    return kernel


# ----------------------------------------------------------------------------
# Wrapper: weight packing (channel padding, bf16, few DMAs) + pallas_call
# ----------------------------------------------------------------------------
def _full_spec(arr):
    zeros = (0,) * arr.ndim
    return pl.BlockSpec(arr.shape, lambda i, _z=zeros: _z)


def _pad2d(w, rows, cols):
    out = jnp.zeros((rows, cols), w.dtype)
    return out.at[:w.shape[0], :w.shape[1]].set(w)


def _pad_col(v, rows):
    out = jnp.zeros((rows,), v.dtype)
    return out.at[:v.shape[0]].set(v)


def tcn_classifier_forward(x, params, *, kernel_size):
    """x: (B, in_channels, T) float32 -> logits (B, num_class)."""
    B, c_in0, T = x.shape
    K = kernel_size
    blocks = params["blocks"]
    cdtype = COMPUTE_DTYPE

    # ---- static config: channel sizes, dilation schedule (2**i per block) ----
    cfgs = []
    c_max = c_in0
    d_max = 1
    for i, blk in enumerate(blocks):
        _, c_out, c_in = blk["w1"].shape
        d = 2 ** i
        cfgs.append((c_in, c_out, d, blk["wd"] is not None))
        c_max = max(c_max, c_in, c_out)
        d_max = max(d_max, d)
    c_max = _round_up(c_max, 8)
    P_MAX = (K - 1) * d_max
    TP = T + P_MAX
    LOUT = B * TP
    LE = P_MAX + LOUT

    reduced = params["w_lin"].shape[0]
    out_ch = params["w_lin"].shape[1]
    clf_hidden = params["w_clf1"].shape[1]
    num_class = params["w_clf2"].shape[1]
    HP = _round_up(max(out_ch, clf_hidden, num_class, 8), 8)
    HW = max(HP, c_max)

    # ---- pack ALL conv weights / biases into two arrays (2 DMAs) ----
    w_tiles = []
    b_cols = []
    for blk, (c_in, c_out, _, down) in zip(blocks, cfgs):
        for k in range(K):
            w_tiles.append(_pad2d(blk["w1"][k], c_max, c_max))
        b_cols.append(_pad_col(blk["b1"], c_max))
        for k in range(K):
            w_tiles.append(_pad2d(blk["w2"][k], c_max, c_max))
        b_cols.append(_pad_col(blk["b2"], c_max))
        if down:
            w_tiles.append(_pad2d(blk["wd"], c_max, c_max))
            b_cols.append(_pad_col(blk["bd"], c_max))
    wconv = jnp.stack(w_tiles, axis=0).astype(cdtype)         # (NM, c_max, c_max)
    bconv = jnp.stack(b_cols, axis=1).astype(jnp.float32)     # (c_max, NB)

    # ---- pack the 3 head matrices / biases into two arrays (2 DMAs) ----
    wl_t = _pad2d(params["w_lin"].T, HP, HW)       # Linear(reduced -> out_ch)
    wc1_t = _pad2d(params["w_clf1"].T, HP, HW)     # Linear(out_ch -> clf_hidden)
    wc2_t = _pad2d(params["w_clf2"].T, HP, HW)     # Linear(clf_hidden -> num_class)
    whead = jnp.stack([wl_t, wc1_t, wc2_t], axis=0).astype(cdtype)    # (3, HP, HW)
    bhead = jnp.stack([_pad_col(params["b_lin"].reshape(-1), HP),
                       _pad_col(params["b_clf1"].reshape(-1), HP),
                       _pad_col(params["b_clf2"].reshape(-1), HP)],
                      axis=1).astype(jnp.float32)                     # (HP, 3)

    # ---- pack the input: lane layout [guard | b0: pad|data | b1: pad|data ...]
    xp = jnp.zeros((c_max, LE), jnp.float32)
    for b in range(B):
        start = P_MAX + b * TP + P_MAX
        xp = xp.at[:c_in0, start:start + T].set(x[b].astype(jnp.float32))

    inputs = [xp, wconv, bconv, whead, bhead]

    # ---- rough cost hint for XLA's scheduler ----
    flops = 0
    for (_, _, _, down) in cfgs:
        flops += 2 * (2 * K) * c_max * c_max * LOUT
        if down:
            flops += 2 * c_max * c_max * LOUT
    flops += 3 * 2 * HP * HW * B
    bytes_accessed = sum(int(a.size) * a.dtype.itemsize for a in inputs) \
        + B * num_class * 4
    cost = pl.CostEstimate(flops=int(flops), transcendentals=0,
                           bytes_accessed=int(bytes_accessed))

    kernel = make_fused_kernel(cfgs, K=K, T=T, P_MAX=P_MAX, C_MAX=c_max, HP=HP,
                               HW=HW, B=B, num_class=num_class, cdtype=cdtype)

    out_cb = pl.pallas_call(
        kernel,
        out_shape=jax.ShapeDtypeStruct((num_class, B), jnp.float32),
        grid=(1,),
        in_specs=[_full_spec(a) for a in inputs],
        out_specs=pl.BlockSpec((num_class, B), lambda i: (0, 0)),
        scratch_shapes=[pltpu.VMEM((c_max, LE), jnp.float32)],  # single activation slab
        compiler_params=pltpu.CompilerParams(
            dimension_semantics=("arbitrary",)),
        cost_estimate=cost,
    )(*inputs)
    return out_cb.T                                        # (B, num_class)


# ----------------------------------------------------------------------------
# Parameter init (deterministic, synthetic; weight_norm => raw weights at init)
# ----------------------------------------------------------------------------
def init_params(key, in_channels, channels, depth, reduced_size, out_channels,
                kernel_size, clf_hidden_node, num_class):
    params = {"blocks": []}

    cfgs = []
    dilation = 1
    for i in range(depth):
        cin = in_channels if i == 0 else channels
        cfgs.append((cin, channels, dilation))
        dilation *= 2
    cfgs.append((channels, reduced_size, dilation))

    def nrm(k, shape):
        return 0.1 * jax.random.normal(k, shape, jnp.float32)

    for (cin, cout, _) in cfgs:
        key, k1, k2, k3, k4, k5, k6 = jax.random.split(key, 7)
        blk = {
            "w1": nrm(k1, (kernel_size, cout, cin)),   # tap-major (K, C_out, C_in)
            "b1": nrm(k2, (cout,)),
            "w2": nrm(k3, (kernel_size, cout, cout)),
            "b2": nrm(k4, (cout,)),
        }
        if cin != cout:
            blk["wd"] = nrm(k5, (cout, cin))           # 1x1 conv weight
            blk["bd"] = nrm(k6, (cout,))
        else:
            blk["wd"] = None
            blk["bd"] = None
        params["blocks"].append(blk)

    key, k1, k2, k3, k4, k5, k6 = jax.random.split(key, 7)
    params["w_lin"] = nrm(k1, (reduced_size, out_channels))   # (in, out)
    params["b_lin"] = nrm(k2, (1, out_channels))
    params["w_clf1"] = nrm(k3, (out_channels, clf_hidden_node))
    params["b_clf1"] = nrm(k4, (1, clf_hidden_node))
    params["w_clf2"] = nrm(k5, (clf_hidden_node, num_class))
    params["b_clf2"] = nrm(k6, (1, num_class))
    return params


if __name__ == "__main__":
    # Small, module-consistent shapes.
    B, in_channels, T = 2, 4, 16
    channels, depth, reduced_size = 8, 2, 16
    out_channels, kernel_size = 10, 3
    clf_hidden_node, num_class = 32, 5
    clf_dropout_rate = 0.1  # identity at eval

    key = jax.random.PRNGKey(0)
    k_x, k_p = jax.random.split(key)
    x = jax.random.normal(k_x, (B, in_channels, T), jnp.float32)
    params = init_params(k_p, in_channels, channels, depth, reduced_size,
                         out_channels, kernel_size, clf_hidden_node, num_class)

    fwd = jax.jit(functools.partial(tcn_classifier_forward,
                                    kernel_size=kernel_size))
    logits = jax.block_until_ready(fwd(x, params))
    assert logits.shape == (B, num_class), logits.shape
    assert bool(jnp.all(jnp.isfinite(logits)))
    print("KERNEL_OK")
</pallas_src>

<mosaic_0001>
module attributes {stable_mosaic.version = 11 : i64} {
  func.func @kernel(%arg0: i32, %arg1: memref<16x56xf32, #tpu.memory_space<vmem>>, %arg2: memref<20x16x16xbf16, #tpu.memory_space<vmem>>, %arg3: memref<16x8xf32, #tpu.memory_space<vmem>>, %arg4: memref<3x32x32xbf16, #tpu.memory_space<vmem>>, %arg5: memref<32x3xf32, #tpu.memory_space<vmem>>, %arg6: memref<5x2xf32, #tpu.memory_space<vmem>>, %arg7: memref<16x56xf32, #tpu.memory_space<vmem>>) attributes {dimension_semantics = [#tpu.dimension_semantics<arbitrary>], iteration_bounds = array<i64: 1>, scalar_prefetch = 0 : i64, scratch_operands = 1 : i64, tpu.core_type = #tpu.core_type<tc>, window_params = [{pipeline_mode = #tpu.pipeline_mode<synchronous>, transform_indices = @transform_0, window_bounds = array<i64: 16, 56>}, {pipeline_mode = #tpu.pipeline_mode<synchronous>, transform_indices = @transform_1, window_bounds = array<i64: 20, 16, 16>}, {pipeline_mode = #tpu.pipeline_mode<synchronous>, transform_indices = @transform_2, window_bounds = array<i64: 16, 8>}, {pipeline_mode = #tpu.pipeline_mode<synchronous>, transform_indices = @transform_3, window_bounds = array<i64: 3, 32, 32>}, {pipeline_mode = #tpu.pipeline_mode<synchronous>, transform_indices = @transform_4, window_bounds = array<i64: 32, 3>}, {pipeline_mode = #tpu.pipeline_mode<synchronous>, transform_indices = @transform_5, window_bounds = array<i64: 5, 2>}]} {
    %0 = tpu.iota {dimensions = array<i32: 1>} : vector<1x48xi32>
    %c0_i32 = arith.constant 0 : i32
    %1 = vector.broadcast %c0_i32 : i32 to vector<1x48xi32>
    %2 = arith.cmpi slt, %0, %1 : vector<1x48xi32>
    %c8_i32 = arith.constant 8 : i32
    %3 = vector.broadcast %c8_i32 : i32 to vector<1x48xi32>
    %4 = arith.cmpi sge, %0, %3 : vector<1x48xi32>
    %c24_i32 = arith.constant 24 : i32
    %5 = vector.broadcast %c24_i32 : i32 to vector<1x48xi32>
    %6 = arith.cmpi slt, %0, %5 : vector<1x48xi32>
    %7 = arith.andi %4, %6 : vector<1x48xi1>
    %8 = arith.ori %2, %7 : vector<1x48xi1>
    %c32_i32 = arith.constant 32 : i32
    %9 = vector.broadcast %c32_i32 : i32 to vector<1x48xi32>
    %10 = arith.cmpi sge, %0, %9 : vector<1x48xi32>
    %c48_i32 = arith.constant 48 : i32
    %11 = vector.broadcast %c48_i32 : i32 to vector<1x48xi32>
    %12 = arith.cmpi slt, %0, %11 : vector<1x48xi32>
    %13 = arith.andi %10, %12 : vector<1x48xi1>
    %14 = arith.ori %8, %13 : vector<1x48xi1>
    %15 = arith.extui %14 : vector<1x48xi1> to vector<1x48xi32>
    %16 = arith.sitofp %15 : vector<1x48xi32> to vector<1x48xf32>
    %cst = arith.constant 0.000000e+00 : f32
    %17 = vector.broadcast %cst : f32 to vector<16x8xf32>
    %c0 = arith.constant 0 : index
    %c0_0 = arith.constant 0 : index
    %18 = vector.load %arg7[%c0, %c0_0] : memref<16x56xf32, #tpu.memory_space<vmem>>, vector<16x8xf32>
    tpu.vector_store %arg7[%c0, %c0_0], %17 {strides = array<i32>} : memref<16x56xf32, #tpu.memory_space<vmem>>, vector<16x8xf32>,
    %c0_1 = arith.constant 0 : index
    %c0_2 = arith.constant 0 : index
    %19 = vector.load %arg3[%c0_1, %c0_2] : memref<16x8xf32, #tpu.memory_space<vmem>>, vector<16x8xf32>
    %c0_3 = arith.constant 0 : index
    %c0_4 = arith.constant 0 : index
    %20 = vector.load %arg1[%c0_3, %c0_4] : memref<16x56xf32, #tpu.memory_space<vmem>>, vector<16x56xf32>
    %21 = vector.extract_strided_slice %20 {offsets = [0, 6], sizes = [16, 48], strides = [1, 1]} : vector<16x56xf32> to vector<16x48xf32>
    %22 = arith.truncf %21 : vector<16x48xf32> to vector<16x48xbf16>
    %c0_5 = arith.constant 0 : index
    %c0_6 = arith.constant 0 : index
    %c0_7 = arith.constant 0 : index
    %23 = vector.load %arg2[%c0_5, %c0_6, %c0_7] : memref<20x16x16xbf16, #tpu.memory_space<vmem>>, vector<1x16x16xbf16>
    %24 = vector.shape_cast %23 : vector<1x16x16xbf16> to vector<16x16xbf16>
    %cst_8 = arith.constant dense<0.000000e+00> : vector<16x48xf32>
    %25 = tpu.matmul %24, %22, %cst_8 {dimension_numbers = #tpu.dot_dimension_numbers<[1], [0], [0], [1], [0, 0, 1, 1], [], []>} : vector<16x16xbf16>, vector<16x48xbf16>, vector<16x48xf32> -> vector<16x48xf32>
    %26 = vector.extract_strided_slice %20 {offsets = [0, 7], sizes = [16, 48], strides = [1, 1]} : vector<16x56xf32> to vector<16x48xf32>
    %27 = arith.truncf %26 : vector<16x48xf32> to vector<16x48xbf16>
    %c1 = arith.constant 1 : index
    %c0_9 = arith.constant 0 : index
    %c0_10 = arith.constant 0 : index
    %28 = vector.load %arg2[%c1, %c0_9, %c0_10] : memref<20x16x16xbf16, #tpu.memory_space<vmem>>, vector<1x16x16xbf16>
    %29 = vector.shape_cast %28 : vector<1x16x16xbf16> to vector<16x16xbf16>
    %cst_11 = arith.constant dense<0.000000e+00> : vector<16x48xf32>
    %30 = tpu.matmul %29, %27, %cst_11 {dimension_numbers = #tpu.dot_dimension_numbers<[1], [0], [0], [1], [0, 0, 1, 1], [], []>} : vector<16x16xbf16>, vector<16x48xbf16>, vector<16x48xf32> -> vector<16x48xf32>
    %31 = arith.addf %25, %30 : vector<16x48xf32>
    %32 = vector.extract_strided_slice %20 {offsets = [0, 8], sizes = [16, 48], strides = [1, 1]} : vector<16x56xf32> to vector<16x48xf32>
    %33 = arith.truncf %32 : vector<16x48xf32> to vector<16x48xbf16>
    %c2 = arith.constant 2 : index
    %c0_12 = arith.constant 0 : index
    %c0_13 = arith.constant 0 : index
    %34 = vector.load %arg2[%c2, %c0_12, %c0_13] : memref<20x16x16xbf16, #tpu.memory_space<vmem>>, vector<1x16x16xbf16>
    %35 = vector.shape_cast %34 : vector<1x16x16xbf16> to vector<16x16xbf16>
    %cst_14 = arith.constant dense<0.000000e+00> : vector<16x48xf32>
    %36 = tpu.matmul %35, %33, %cst_14 {dimension_numbers = #tpu.dot_dimension_numbers<[1], [0], [0], [1], [0, 0, 1, 1], [], []>} : vector<16x16xbf16>, vector<16x48xbf16>, vector<16x48xf32> -> vector<16x48xf32>
    %37 = arith.addf %31, %36 : vector<16x48xf32>
    %38 = vector.extract_strided_slice %19 {offsets = [0, 0], sizes = [16, 1], strides = [1, 1]} : vector<16x8xf32> to vector<16x1xf32>
    %39 = vector.broadcast %38 : vector<16x1xf32> to vector<16x48xf32>
    %40 = arith.addf %37, %39 : vector<16x48xf32>
    %cst_15 = arith.constant 0.000000e+00 : f32
    %41 = vector.broadcast %cst_15 : f32 to vector<16x48xf32>
    %42 = arith.cmpf ogt, %40, %41 : vector<16x48xf32>
    %cst_16 = arith.constant 0.00999999977 : f32
    %43 = vector.broadcast %cst_16 : f32 to vector<16x48xf32>
    %44 = arith.mulf %43, %40 : vector<16x48xf32>
    %45 = arith.select %42, %40, %44 : vector<16x48xi1>, vector<16x48xf32>
    %46 = vector.broadcast %16 : vector<1x48xf32> to vector<16x48xf32>
    %47 = arith.mulf %45, %46 : vector<16x48xf32>
    %c0_17 = arith.constant 0 : index
    %c8 = arith.constant 8 : index
    %48 = vector.load %arg7[%c0_17, %c8] : memref<16x56xf32, #tpu.memory_space<vmem>>, vector<16x48xf32>
    tpu.vector_store %arg7[%c0_17, %c8], %47 {strides = array<i32>} : memref<16x56xf32, #tpu.memory_space<vmem>>, vector<16x48xf32>,
    %c0_18 = arith.constant 0 : index
    %c0_19 = arith.constant 0 : index
    %49 = vector.load %arg7[%c0_18, %c0_19] : memref<16x56xf32, #tpu.memory_space<vmem>>, vector<16x56xf32>
    %50 = vector.extract_strided_slice %49 {offsets = [0, 6], sizes = [16, 48], strides = [1, 1]} : vector<16x56xf32> to vector<16x48xf32>
    %51 = arith.truncf %50 : vector<16x48xf32> to vector<16x48xbf16>
    %c3 = arith.constant 3 : index
    %c0_20 = arith.constant 0 : index
    %c0_21 = arith.constant 0 : index
    %52 = vector.load %arg2[%c3, %c0_20, %c0_21] : memref<20x16x16xbf16, #tpu.memory_space<vmem>>, vector<1x16x16xbf16>
    %53 = vector.shape_cast %52 : vector<1x16x16xbf16> to vector<16x16xbf16>
    %cst_22 = arith.constant dense<0.000000e+00> : vector<16x48xf32>
    %54 = tpu.matmul %53, %51, %cst_22 {dimension_numbers = #tpu.dot_dimension_numbers<[1], [0], [0], [1], [0, 0, 1, 1], [], []>} : vector<16x16xbf16>, vector<16x48xbf16>, vector<16x48xf32> -> vector<16x48xf32>
    %55 = vector.extract_strided_slice %49 {offsets = [0, 7], sizes = [16, 48], strides = [1, 1]} : vector<16x56xf32> to vector<16x48xf32>
    %56 = arith.truncf %55 : vector<16x48xf32> to vector<16x48xbf16>
    %c4 = arith.constant 4 : index
    %c0_23 = arith.constant 0 : index
    %c0_24 = arith.constant 0 : index
    %57 = vector.load %arg2[%c4, %c0_23, %c0_24] : memref<20x16x16xbf16, #tpu.memory_space<vmem>>, vector<1x16x16xbf16>
    %58 = vector.shape_cast %57 : vector<1x16x16xbf16> to vector<16x16xbf16>
    %cst_25 = arith.constant dense<0.000000e+00> : vector<16x48xf32>
    %59 = tpu.matmul %58, %56, %cst_25 {dimension_numbers = #tpu.dot_dimension_numbers<[1], [0], [0], [1], [0, 0, 1, 1], [], []>} : vector<16x16xbf16>, vector<16x48xbf16>, vector<16x48xf32> -> vector<16x48xf32>
    %60 = arith.addf %54, %59 : vector<16x48xf32>
    %61 = vector.extract_strided_slice %49 {offsets = [0, 8], sizes = [16, 48], strides = [1, 1]} : vector<16x56xf32> to vector<16x48xf32>
    %62 = arith.truncf %61 : vector<16x48xf32> to vector<16x48xbf16>
    %c5 = arith.constant 5 : index
    %c0_26 = arith.constant 0 : index
    %c0_27 = arith.constant 0 : index
    %63 = vector.load %arg2[%c5, %c0_26, %c0_27] : memref<20x16x16xbf16, #tpu.memory_space<vmem>>, vector<1x16x16xbf16>
    %64 = vector.shape_cast %63 : vector<1x16x16xbf16> to vector<16x16xbf16>
    %cst_28 = arith.constant dense<0.000000e+00> : vector<16x48xf32>
    %65 = tpu.matmul %64, %62, %cst_28 {dimension_numbers = #tpu.dot_dimension_numbers<[1], [0], [0], [1], [0, 0, 1, 1], [], []>} : vector<16x16xbf16>, vector<16x48xbf16>, vector<16x48xf32> -> vector<16x48xf32>
    %66 = arith.addf %60, %65 : vector<16x48xf32>
    %67 = vector.extract_strided_slice %19 {offsets = [0, 1], sizes = [16, 1], strides = [1, 1]} : vector<16x8xf32> to vector<16x1xf32>
    %68 = vector.broadcast %67 : vector<16x1xf32> to vector<16x48xf32>
    %69 = arith.addf %66, %68 : vector<16x48xf32>
    %cst_29 = arith.constant 0.000000e+00 : f32
    %70 = vector.broadcast %cst_29 : f32 to vector<16x48xf32>
    %71 = arith.cmpf ogt, %69, %70 : vector<16x48xf32>
    %cst_30 = arith.constant 0.00999999977 : f32
    %72 = vector.broadcast %cst_30 : f32 to vector<16x48xf32>
    %73 = arith.mulf %72, %69 : vector<16x48xf32>
    %74 = arith.select %71, %69, %73 : vector<16x48xi1>, vector<16x48xf32>
    %c6 = arith.constant 6 : index
    %c0_31 = arith.constant 0 : index
    %c0_32 = arith.constant 0 : index
    %75 = vector.load %arg2[%c6, %c0_31, %c0_32] : memref<20x16x16xbf16, #tpu.memory_space<vmem>>, vector<1x16x16xbf16>
    %76 = vector.shape_cast %75 : vector<1x16x16xbf16> to vector<16x16xbf16>
    %77 = vector.extract_strided_slice %20 {offsets = [0, 8], sizes = [16, 48], strides = [1, 1]} : vector<16x56xf32> to vector<16x48xf32>
    %78 = arith.truncf %77 : vector<16x48xf32> to vector<16x48xbf16>
    %cst_33 = arith.constant dense<0.000000e+00> : vector<16x48xf32>
    %79 = tpu.matmul %76, %78, %cst_33 {dimension_numbers = #tpu.dot_dimension_numbers<[1], [0], [0], [1], [0, 0, 1, 1], [], []>} : vector<16x16xbf16>, vector<16x48xbf16>, vector<16x48xf32> -> vector<16x48xf32>
    %80 = vector.extract_strided_slice %19 {offsets = [0, 2], sizes = [16, 1], strides = [1, 1]} : vector<16x8xf32> to vector<16x1xf32>
    %81 = vector.broadcast %80 : vector<16x1xf32> to vector<16x48xf32>
    %82 = arith.addf %79, %81 : vector<16x48xf32>
    %83 = arith.addf %74, %82 : vector<16x48xf32>
    %84 = vector.broadcast %16 : vector<1x48xf32> to vector<16x48xf32>
    %85 = arith.mulf %83, %84 : vector<16x48xf32>
    %c0_34 = arith.constant 0 : index
    %c8_35 = arith.constant 8 : index
    %86 = vector.load %arg7[%c0_34, %c8_35] : memref<16x56xf32, #tpu.memory_space<vmem>>, vector<16x48xf32>
    tpu.vector_store %arg7[%c0_34, %c8_35], %85 {strides = array<i32>} : memref<16x56xf32, #tpu.memory_space<vmem>>, vector<16x48xf32>,
    %c0_36 = arith.constant 0 : index
    %c0_37 = arith.constant 0 : index
    %87 = vector.load %arg7[%c0_36, %c0_37] : memref<16x56xf32, #tpu.memory_space<vmem>>, vector<16x56xf32>
    %88 = vector.extract_strided_slice %87 {offsets = [0, 4], sizes = [16, 48], strides = [1, 1]} : vector<16x56xf32> to vector<16x48xf32>
    %89 = arith.truncf %88 : vector<16x48xf32> to vector<16x48xbf16>
    %c7 = arith.constant 7 : index
    %c0_38 = arith.constant 0 : index
    %c0_39 = arith.constant 0 : index
    %90 = vector.load %arg2[%c7, %c0_38, %c0_39] : memref<20x16x16xbf16, #tpu.memory_space<vmem>>, vector<1x16x16xbf16>
    %91 = vector.shape_cast %90 : vector<1x16x16xbf16> to vector<16x16xbf16>
    %cst_40 = arith.constant dense<0.000000e+00> : vector<16x48xf32>
    %92 = tpu.matmul %91, %89, %cst_40 {dimension_numbers = #tpu.dot_dimension_numbers<[1], [0], [0], [1], [0, 0, 1, 1], [], []>} : vector<16x16xbf16>, vector<16x48xbf16>, vector<16x48xf32> -> vector<16x48xf32>
    %93 = vector.extract_strided_slice %87 {offsets = [0, 6], sizes = [16, 48], strides = [1, 1]} : vector<16x56xf32> to vector<16x48xf32>
    %94 = arith.truncf %93 : vector<16x48xf32> to vector<16x48xbf16>
    %c8_41 = arith.constant 8 : index
    %c0_42 = arith.constant 0 : index
    %c0_43 = arith.constant 0 : index
    %95 = vector.load %arg2[%c8_41, %c0_42, %c0_43] : memref<20x16x16xbf16, #tpu.memory_space<vmem>>, vector<1x16x16xbf16>
    %96 = vector.shape_cast %95 : vector<1x16x16xbf16> to vector<16x16xbf16>
    %cst_44 = arith.constant dense<0.000000e+00> : vector<16x48xf32>
    %97 = tpu.matmul %96, %94, %cst_44 {dimension_numbers = #tpu.dot_dimension_numbers<[1], [0], [0], [1], [0, 0, 1, 1], [], []>} : vector<16x16xbf16>, vector<16x48xbf16>, vector<16x48xf32> -> vector<16x48xf32>
    %98 = arith.addf %92, %97 : vector<16x48xf32>
    %99 = vector.extract_strided_slice %87 {offsets = [0, 8], sizes = [16, 48], strides = [1, 1]} : vector<16x56xf32> to vector<16x48xf32>
    %100 = arith.truncf %99 : vector<16x48xf32> to vector<16x48xbf16>
    %c9 = arith.constant 9 : index
    %c0_45 = arith.constant 0 : index
    %c0_46 = arith.constant 0 : index
    %101 = vector.load %arg2[%c9, %c0_45, %c0_46] : memref<20x16x16xbf16, #tpu.memory_space<vmem>>, vector<1x16x16xbf16>
    %102 = vector.shape_cast %101 : vector<1x16x16xbf16> to vector<16x16xbf16>
    %cst_47 = arith.constant dense<0.000000e+00> : vector<16x48xf32>
    %103 = tpu.matmul %102, %100, %cst_47 {dimension_numbers = #tpu.dot_dimension_numbers<[1], [0], [0], [1], [0, 0, 1, 1], [], []>} : vector<16x16xbf16>, vector<16x48xbf16>, vector<16x48xf32> -> vector<16x48xf32>
    %104 = arith.addf %98, %103 : vector<16x48xf32>
    %105 = vector.extract_strided_slice %19 {offsets = [0, 3], sizes = [16, 1], strides = [1, 1]} : vector<16x8xf32> to vector<16x1xf32>
    %106 = vector.broadcast %105 : vector<16x1xf32> to vector<16x48xf32>
    %107 = arith.addf %104, %106 : vector<16x48xf32>
    %cst_48 = arith.constant 0.000000e+00 : f32
    %108 = vector.broadcast %cst_48 : f32 to vector<16x48xf32>
    %109 = arith.cmpf ogt, %107, %108 : vector<16x48xf32>
    %cst_49 = arith.constant 0.00999999977 : f32
    %110 = vector.broadcast %cst_49 : f32 to vector<16x48xf32>
    %111 = arith.mulf %110, %107 : vector<16x48xf32>
    %112 = arith.select %109, %107, %111 : vector<16x48xi1>, vector<16x48xf32>
    %113 = vector.broadcast %16 : vector<1x48xf32> to vector<16x48xf32>
    %114 = arith.mulf %112, %113 : vector<16x48xf32>
    %c0_50 = arith.constant 0 : index
    %c8_51 = arith.constant 8 : index
    %115 = vector.load %arg7[%c0_50, %c8_51] : memref<16x56xf32, #tpu.memory_space<vmem>>, vector<16x48xf32>
    tpu.vector_store %arg7[%c0_50, %c8_51], %114 {strides = array<i32>} : memref<16x56xf32, #tpu.memory_space<vmem>>, vector<16x48xf32>,
    %c0_52 = arith.constant 0 : index
    %c0_53 = arith.constant 0 : index
    %116 = vector.load %arg7[%c0_52, %c0_53] : memref<16x56xf32, #tpu.memory_space<vmem>>, vector<16x56xf32>
    %117 = vector.extract_strided_slice %116 {offsets = [0, 4], sizes = [16, 48], strides = [1, 1]} : vector<16x56xf32> to vector<16x48xf32>
    %118 = arith.truncf %117 : vector<16x48xf32> to vector<16x48xbf16>
    %c10 = arith.constant 10 : index
    %c0_54 = arith.constant 0 : index
    %c0_55 = arith.constant 0 : index
    %119 = vector.load %arg2[%c10, %c0_54, %c0_55] : memref<20x16x16xbf16, #tpu.memory_space<vmem>>, vector<1x16x16xbf16>
    %120 = vector.shape_cast %119 : vector<1x16x16xbf16> to vector<16x16xbf16>
    %cst_56 = arith.constant dense<0.000000e+00> : vector<16x48xf32>
    %121 = tpu.matmul %120, %118, %cst_56 {dimension_numbers = #tpu.dot_dimension_numbers<[1], [0], [0], [1], [0, 0, 1, 1], [], []>} : vector<16x16xbf16>, vector<16x48xbf16>, vector<16x48xf32> -> vector<16x48xf32>
    %122 = vector.extract_strided_slice %116 {offsets = [0, 6], sizes = [16, 48], strides = [1, 1]} : vector<16x56xf32> to vector<16x48xf32>
    %123 = arith.truncf %122 : vector<16x48xf32> to vector<16x48xbf16>
    %c11 = arith.constant 11 : index
    %c0_57 = arith.constant 0 : index
    %c0_58 = arith.constant 0 : index
    %124 = vector.load %arg2[%c11, %c0_57, %c0_58] : memref<20x16x16xbf16, #tpu.memory_space<vmem>>, vector<1x16x16xbf16>
    %125 = vector.shape_cast %124 : vector<1x16x16xbf16> to vector<16x16xbf16>
    %cst_59 = arith.constant dense<0.000000e+00> : vector<16x48xf32>
    %126 = tpu.matmul %125, %123, %cst_59 {dimension_numbers = #tpu.dot_dimension_numbers<[1], [0], [0], [1], [0, 0, 1, 1], [], []>} : vector<16x16xbf16>, vector<16x48xbf16>, vector<16x48xf32> -> vector<16x48xf32>
    %127 = arith.addf %121, %126 : vector<16x48xf32>
    %128 = vector.extract_strided_slice %116 {offsets = [0, 8], sizes = [16, 48], strides = [1, 1]} : vector<16x56xf32> to vector<16x48xf32>
    %129 = arith.truncf %128 : vector<16x48xf32> to vector<16x48xbf16>
    %c12 = arith.constant 12 : index
    %c0_60 = arith.constant 0 : index
    %c0_61 = arith.constant 0 : index
    %130 = vector.load %arg2[%c12, %c0_60, %c0_61] : memref<20x16x16xbf16, #tpu.memory_space<vmem>>, vector<1x16x16xbf16>
    %131 = vector.shape_cast %130 : vector<1x16x16xbf16> to vector<16x16xbf16>
    %cst_62 = arith.constant dense<0.000000e+00> : vector<16x48xf32>
    %132 = tpu.matmul %131, %129, %cst_62 {dimension_numbers = #tpu.dot_dimension_numbers<[1], [0], [0], [1], [0, 0, 1, 1], [], []>} : vector<16x16xbf16>, vector<16x48xbf16>, vector<16x48xf32> -> vector<16x48xf32>
    %133 = arith.addf %127, %132 : vector<16x48xf32>
    %134 = vector.extract_strided_slice %19 {offsets = [0, 4], sizes = [16, 1], strides = [1, 1]} : vector<16x8xf32> to vector<16x1xf32>
    %135 = vector.broadcast %134 : vector<16x1xf32> to vector<16x48xf32>
    %136 = arith.addf %133, %135 : vector<16x48xf32>
    %cst_63 = arith.constant 0.000000e+00 : f32
    %137 = vector.broadcast %cst_63 : f32 to vector<16x48xf32>
    %138 = arith.cmpf ogt, %136, %137 : vector<16x48xf32>
    %cst_64 = arith.constant 0.00999999977 : f32
    %139 = vector.broadcast %cst_64 : f32 to vector<16x48xf32>
    %140 = arith.mulf %139, %136 : vector<16x48xf32>
    %141 = arith.select %138, %136, %140 : vector<16x48xi1>, vector<16x48xf32>
    %142 = vector.extract_strided_slice %87 {offsets = [0, 8], sizes = [16, 48], strides = [1, 1]} : vector<16x56xf32> to vector<16x48xf32>
    %143 = arith.addf %141, %142 : vector<16x48xf32>
    %144 = vector.broadcast %16 : vector<1x48xf32> to vector<16x48xf32>
    %145 = arith.mulf %143, %144 : vector<16x48xf32>
    %c0_65 = arith.constant 0 : index
    %c8_66 = arith.constant 8 : index
    %146 = vector.load %arg7[%c0_65, %c8_66] : memref<16x56xf32, #tpu.memory_space<vmem>>, vector<16x48xf32>
    tpu.vector_store %arg7[%c0_65, %c8_66], %145 {strides = array<i32>} : memref<16x56xf32, #tpu.memory_space<vmem>>, vector<16x48xf32>,
    %c0_67 = arith.constant 0 : index
    %c0_68 = arith.constant 0 : index
    %147 = vector.load %arg7[%c0_67, %c0_68] : memref<16x56xf32, #tpu.memory_space<vmem>>, vector<16x56xf32>
    %148 = vector.extract_strided_slice %147 {offsets = [0, 0], sizes = [16, 48], strides = [1, 1]} : vector<16x56xf32> to vector<16x48xf32>
    %149 = arith.truncf %148 : vector<16x48xf32> to vector<16x48xbf16>
    %c13 = arith.constant 13 : index
    %c0_69 = arith.constant 0 : index
    %c0_70 = arith.constant 0 : index
    %150 = vector.load %arg2[%c13, %c0_69, %c0_70] : memref<20x16x16xbf16, #tpu.memory_space<vmem>>, vector<1x16x16xbf16>
    %151 = vector.shape_cast %150 : vector<1x16x16xbf16> to vector<16x16xbf16>
    %cst_71 = arith.constant dense<0.000000e+00> : vector<16x48xf32>
    %152 = tpu.matmul %151, %149, %cst_71 {dimension_numbers = #tpu.dot_dimension_numbers<[1], [0], [0], [1], [0, 0, 1, 1], [], []>} : vector<16x16xbf16>, vector<16x48xbf16>, vector<16x48xf32> -> vector<16x48xf32>
    %153 = vector.extract_strided_slice %147 {offsets = [0, 4], sizes = [16, 48], strides = [1, 1]} : vector<16x56xf32> to vector<16x48xf32>
    %154 = arith.truncf %153 : vector<16x48xf32> to vector<16x48xbf16>
    %c14 = arith.constant 14 : index
    %c0_72 = arith.constant 0 : index
    %c0_73 = arith.constant 0 : index
    %155 = vector.load %arg2[%c14, %c0_72, %c0_73] : memref<20x16x16xbf16, #tpu.memory_space<vmem>>, vector<1x16x16xbf16>
    %156 = vector.shape_cast %155 : vector<1x16x16xbf16> to vector<16x16xbf16>
    %cst_74 = arith.constant dense<0.000000e+00> : vector<16x48xf32>
    %157 = tpu.matmul %156, %154, %cst_74 {dimension_numbers = #tpu.dot_dimension_numbers<[1], [0], [0], [1], [0, 0, 1, 1], [], []>} : vector<16x16xbf16>, vector<16x48xbf16>, vector<16x48xf32> -> vector<16x48xf32>
    %158 = arith.addf %152, %157 : vector<16x48xf32>
    %159 = vector.extract_strided_slice %147 {offsets = [0, 8], sizes = [16, 48], strides = [1, 1]} : vector<16x56xf32> to vector<16x48xf32>
    %160 = arith.truncf %159 : vector<16x48xf32> to vector<16x48xbf16>
    %c15 = arith.constant 15 : index
    %c0_75 = arith.constant 0 : index
    %c0_76 = arith.constant 0 : index
    %161 = vector.load %arg2[%c15, %c0_75, %c0_76] : memref<20x16x16xbf16, #tpu.memory_space<vmem>>, vector<1x16x16xbf16>
    %162 = vector.shape_cast %161 : vector<1x16x16xbf16> to vector<16x16xbf16>
    %cst_77 = arith.constant dense<0.000000e+00> : vector<16x48xf32>
    %163 = tpu.matmul %162, %160, %cst_77 {dimension_numbers = #tpu.dot_dimension_numbers<[1], [0], [0], [1], [0, 0, 1, 1], [], []>} : vector<16x16xbf16>, vector<16x48xbf16>, vector<16x48xf32> -> vector<16x48xf32>
    %164 = arith.addf %158, %163 : vector<16x48xf32>
    %165 = vector.extract_strided_slice %19 {offsets = [0, 5], sizes = [16, 1], strides = [1, 1]} : vector<16x8xf32> to vector<16x1xf32>
    %166 = vector.broadcast %165 : vector<16x1xf32> to vector<16x48xf32>
    %167 = arith.addf %164, %166 : vector<16x48xf32>
    %cst_78 = arith.constant 0.000000e+00 : f32
    %168 = vector.broadcast %cst_78 : f32 to vector<16x48xf32>
    %169 = arith.cmpf ogt, %167, %168 : vector<16x48xf32>
    %cst_79 = arith.constant 0.00999999977 : f32
    %170 = vector.broadcast %cst_79 : f32 to vector<16x48xf32>
    %171 = arith.mulf %170, %167 : vector<16x48xf32>
    %172 = arith.select %169, %167, %171 : vector<16x48xi1>, vector<16x48xf32>
    %173 = vector.broadcast %16 : vector<1x48xf32> to vector<16x48xf32>
    %174 = arith.mulf %172, %173 : vector<16x48xf32>
    %c0_80 = arith.constant 0 : index
    %c8_81 = arith.constant 8 : index
    %175 = vector.load %arg7[%c0_80, %c8_81] : memref<16x56xf32, #tpu.memory_space<vmem>>, vector<16x48xf32>
    tpu.vector_store %arg7[%c0_80, %c8_81], %174 {strides = array<i32>} : memref<16x56xf32, #tpu.memory_space<vmem>>, vector<16x48xf32>,
    %c0_82 = arith.constant 0 : index
    %c0_83 = arith.constant 0 : index
    %176 = vector.load %arg7[%c0_82, %c0_83] : memref<16x56xf32, #tpu.memory_space<vmem>>, vector<16x56xf32>
    %177 = vector.extract_strided_slice %176 {offsets = [0, 0], sizes = [16, 48], strides = [1, 1]} : vector<16x56xf32> to vector<16x48xf32>
    %178 = arith.truncf %177 : vector<16x48xf32> to vector<16x48xbf16>
    %c16 = arith.constant 16 : index
    %c0_84 = arith.constant 0 : index
    %c0_85 = arith.constant 0 : index
    %179 = vector.load %arg2[%c16, %c0_84, %c0_85] : memref<20x16x16xbf16, #tpu.memory_space<vmem>>, vector<1x16x16xbf16>
    %180 = vector.shape_cast %179 : vector<1x16x16xbf16> to vector<16x16xbf16>
    %cst_86 = arith.constant dense<0.000000e+00> : vector<16x48xf32>
    %181 = tpu.matmul %180, %178, %cst_86 {dimension_numbers = #tpu.dot_dimension_numbers<[1], [0], [0], [1], [0, 0, 1, 1], [], []>} : vector<16x16xbf16>, vector<16x48xbf16>, vector<16x48xf32> -> vector<16x48xf32>
    %182 = vector.extract_strided_slice %176 {offsets = [0, 4], sizes = [16, 48], strides = [1, 1]} : vector<16x56xf32> to vector<16x48xf32>
    %183 = arith.truncf %182 : vector<16x48xf32> to vector<16x48xbf16>
    %c17 = arith.constant 17 : index
    %c0_87 = arith.constant 0 : index
    %c0_88 = arith.constant 0 : index
    %184 = vector.load %arg2[%c17, %c0_87, %c0_88] : memref<20x16x16xbf16, #tpu.memory_space<vmem>>, vector<1x16x16xbf16>
    %185 = vector.shape_cast %184 : vector<1x16x16xbf16> to vector<16x16xbf16>
    %cst_89 = arith.constant dense<0.000000e+00> : vector<16x48xf32>
    %186 = tpu.matmul %185, %183, %cst_89 {dimension_numbers = #tpu.dot_dimension_numbers<[1], [0], [0], [1], [0, 0, 1, 1], [], []>} : vector<16x16xbf16>, vector<16x48xbf16>, vector<16x48xf32> -> vector<16x48xf32>
    %187 = arith.addf %181, %186 : vector<16x48xf32>
    %188 = vector.extract_strided_slice %176 {offsets = [0, 8], sizes = [16, 48], strides = [1, 1]} : vector<16x56xf32> to vector<16x48xf32>
    %189 = arith.truncf %188 : vector<16x48xf32> to vector<16x48xbf16>
    %c18 = arith.constant 18 : index
    %c0_90 = arith.constant 0 : index
    %c0_91 = arith.constant 0 : index
    %190 = vector.load %arg2[%c18, %c0_90, %c0_91] : memref<20x16x16xbf16, #tpu.memory_space<vmem>>, vector<1x16x16xbf16>
    %191 = vector.shape_cast %190 : vector<1x16x16xbf16> to vector<16x16xbf16>
    %cst_92 = arith.constant dense<0.000000e+00> : vector<16x48xf32>
    %192 = tpu.matmul %191, %189, %cst_92 {dimension_numbers = #tpu.dot_dimension_numbers<[1], [0], [0], [1], [0, 0, 1, 1], [], []>} : vector<16x16xbf16>, vector<16x48xbf16>, vector<16x48xf32> -> vector<16x48xf32>
    %193 = arith.addf %187, %192 : vector<16x48xf32>
    %194 = vector.extract_strided_slice %19 {offsets = [0, 6], sizes = [16, 1], strides = [1, 1]} : vector<16x8xf32> to vector<16x1xf32>
    %195 = vector.broadcast %194 : vector<16x1xf32> to vector<16x48xf32>
    %196 = arith.addf %193, %195 : vector<16x48xf32>
    %cst_93 = arith.constant 0.000000e+00 : f32
    %197 = vector.broadcast %cst_93 : f32 to vector<16x48xf32>
    %198 = arith.cmpf ogt, %196, %197 : vector<16x48xf32>
    %cst_94 = arith.constant 0.00999999977 : f32
    %199 = vector.broadcast %cst_94 : f32 to vector<16x48xf32>
    %200 = arith.mulf %199, %196 : vector<16x48xf32>
    %201 = arith.select %198, %196, %200 : vector<16x48xi1>, vector<16x48xf32>
    %c19 = arith.constant 19 : index
    %c0_95 = arith.constant 0 : index
    %c0_96 = arith.constant 0 : index
    %202 = vector.load %arg2[%c19, %c0_95, %c0_96] : memref<20x16x16xbf16, #tpu.memory_space<vmem>>, vector<1x16x16xbf16>
    %203 = vector.shape_cast %202 : vector<1x16x16xbf16> to vector<16x16xbf16>
    %204 = vector.extract_strided_slice %147 {offsets = [0, 8], sizes = [16, 48], strides = [1, 1]} : vector<16x56xf32> to vector<16x48xf32>
    %205 = arith.truncf %204 : vector<16x48xf32> to vector<16x48xbf16>
    %cst_97 = arith.constant dense<0.000000e+00> : vector<16x48xf32>
    %206 = tpu.matmul %203, %205, %cst_97 {dimension_numbers = #tpu.dot_dimension_numbers<[1], [0], [0], [1], [0, 0, 1, 1], [], []>} : vector<16x16xbf16>, vector<16x48xbf16>, vector<16x48xf32> -> vector<16x48xf32>
    %207 = vector.extract_strided_slice %19 {offsets = [0, 7], sizes = [16, 1], strides = [1, 1]} : vector<16x8xf32> to vector<16x1xf32>
    %208 = vector.broadcast %207 : vector<16x1xf32> to vector<16x48xf32>
    %209 = arith.addf %206, %208 : vector<16x48xf32>
    %210 = arith.addf %201, %209 : vector<16x48xf32>
    %211 = vector.broadcast %16 : vector<1x48xf32> to vector<16x48xf32>
    %212 = arith.mulf %210, %211 : vector<16x48xf32>
    %213 = tpu.iota {dimensions = array<i32: 1>} : vector<1x2xi32>
    %cst_98 = arith.constant 0.000000e+00 : f32
    %214 = vector.broadcast %cst_98 : f32 to vector<16x2xf32>
    %215 = vector.extract_strided_slice %212 {offsets = [0, 8], sizes = [16, 16], strides = [1, 1]} : vector<16x48xf32> to vector<16x16xf32>
    %cst_99 = arith.constant dense<0xFF800000> : vector<16xf32>
    %216 = vector.multi_reduction <maximumf>, %215, %cst_99 [1] : vector<16x16xf32> to vector<16xf32>
    %217 = vector.shape_cast %216 : vector<16xf32> to vector<16x1xf32>
    %c0_i32_100 = arith.constant 0 : i32
    %218 = vector.broadcast %c0_i32_100 : i32 to vector<1x2xi32>
    %219 = arith.cmpi eq, %213, %218 : vector<1x2xi32>
    %220 = arith.extui %219 : vector<1x2xi1> to vector<1x2xi32>
    %221 = arith.sitofp %220 : vector<1x2xi32> to vector<1x2xf32>
    %222 = vector.broadcast %217 : vector<16x1xf32> to vector<16x2xf32>
    %223 = vector.broadcast %221 : vector<1x2xf32> to vector<16x2xf32>
    %224 = arith.mulf %222, %223 : vector<16x2xf32>
    %225 = arith.addf %214, %224 : vector<16x2xf32>
    %226 = vector.extract_strided_slice %212 {offsets = [0, 32], sizes = [16, 16], strides = [1, 1]} : vector<16x48xf32> to vector<16x16xf32>
    %cst_101 = arith.constant dense<0xFF800000> : vector<16xf32>
    %227 = vector.multi_reduction <maximumf>, %226, %cst_101 [1] : vector<16x16xf32> to vector<16xf32>
    %228 = vector.shape_cast %227 : vector<16xf32> to vector<16x1xf32>
    %c1_i32 = arith.constant 1 : i32
    %229 = vector.broadcast %c1_i32 : i32 to vector<1x2xi32>
    %230 = arith.cmpi eq, %213, %229 : vector<1x2xi32>
    %231 = arith.extui %230 : vector<1x2xi1> to vector<1x2xi32>
    %232 = arith.sitofp %231 : vector<1x2xi32> to vector<1x2xf32>
    %233 = vector.broadcast %228 : vector<16x1xf32> to vector<16x2xf32>
    %234 = vector.broadcast %232 : vector<1x2xf32> to vector<16x2xf32>
    %235 = arith.mulf %233, %234 : vector<16x2xf32>
    %236 = arith.addf %225, %235 : vector<16x2xf32>
    %c0_102 = arith.constant 0 : index
    %c0_103 = arith.constant 0 : index
    %237 = vector.load %arg5[%c0_102, %c0_103] : memref<32x3xf32, #tpu.memory_space<vmem>>, vector<32x3xf32>
    %c0_104 = arith.constant 0 : index
    %c0_105 = arith.constant 0 : index
    %c0_106 = arith.constant 0 : index
    %238 = vector.load %arg4[%c0_104, %c0_105, %c0_106] : memref<3x32x32xbf16, #tpu.memory_space<vmem>>, vector<1x32x32xbf16>
    %239 = vector.shape_cast %238 : vector<1x32x32xbf16> to vector<32x32xbf16>
    %240 = vector.extract_strided_slice %239 {offsets = [0, 0], sizes = [32, 16], strides = [1, 1]} : vector<32x32xbf16> to vector<32x16xbf16>
    %241 = arith.truncf %236 : vector<16x2xf32> to vector<16x2xbf16>
    %cst_107 = arith.constant dense<0.000000e+00> : vector<32x2xf32>
    %242 = tpu.matmul %240, %241, %cst_107 {dimension_numbers = #tpu.dot_dimension_numbers<[1], [0], [0], [1], [0, 0, 1, 1], [], []>} : vector<32x16xbf16>, vector<16x2xbf16>, vector<32x2xf32> -> vector<32x2xf32>
    %243 = vector.extract_strided_slice %237 {offsets = [0, 0], sizes = [32, 1], strides = [1, 1]} : vector<32x3xf32> to vector<32x1xf32>
    %244 = vector.broadcast %243 : vector<32x1xf32> to vector<32x2xf32>
    %245 = arith.addf %242, %244 : vector<32x2xf32>
    %c1_108 = arith.constant 1 : index
    %c0_109 = arith.constant 0 : index
    %c0_110 = arith.constant 0 : index
    %246 = vector.load %arg4[%c1_108, %c0_109, %c0_110] : memref<3x32x32xbf16, #tpu.memory_space<vmem>>, vector<1x32x32xbf16>
    %247 = vector.shape_cast %246 : vector<1x32x32xbf16> to vector<32x32xbf16>
    %248 = arith.truncf %245 : vector<32x2xf32> to vector<32x2xbf16>
    %cst_111 = arith.constant dense<0.000000e+00> : vector<32x2xf32>
    %249 = tpu.matmul %247, %248, %cst_111 {dimension_numbers = #tpu.dot_dimension_numbers<[1], [0], [0], [1], [0, 0, 1, 1], [], []>} : vector<32x32xbf16>, vector<32x2xbf16>, vector<32x2xf32> -> vector<32x2xf32>
    %250 = vector.extract_strided_slice %237 {offsets = [0, 1], sizes = [32, 1], strides = [1, 1]} : vector<32x3xf32> to vector<32x1xf32>
    %251 = vector.broadcast %250 : vector<32x1xf32> to vector<32x2xf32>
    %252 = arith.addf %249, %251 : vector<32x2xf32>
    %cst_112 = arith.constant 0.000000e+00 : f32
    %253 = vector.broadcast %cst_112 : f32 to vector<32x2xf32>
    %254 = arith.maximumf %252, %253 : vector<32x2xf32>
    %c2_113 = arith.constant 2 : index
    %c0_114 = arith.constant 0 : index
    %c0_115 = arith.constant 0 : index
    %255 = vector.load %arg4[%c2_113, %c0_114, %c0_115] : memref<3x32x32xbf16, #tpu.memory_space<vmem>>, vector<1x32x32xbf16>
    %256 = vector.shape_cast %255 : vector<1x32x32xbf16> to vector<32x32xbf16>
    %257 = arith.truncf %254 : vector<32x2xf32> to vector<32x2xbf16>
    %cst_116 = arith.constant dense<0.000000e+00> : vector<32x2xf32>
    %258 = tpu.matmul %256, %257, %cst_116 {dimension_numbers = #tpu.dot_dimension_numbers<[1], [0], [0], [1], [0, 0, 1, 1], [], []>} : vector<32x32xbf16>, vector<32x2xbf16>, vector<32x2xf32> -> vector<32x2xf32>
    %259 = vector.extract_strided_slice %237 {offsets = [0, 2], sizes = [32, 1], strides = [1, 1]} : vector<32x3xf32> to vector<32x1xf32>
    %260 = vector.broadcast %259 : vector<32x1xf32> to vector<32x2xf32>
    %261 = arith.addf %258, %260 : vector<32x2xf32>
    %262 = vector.extract_strided_slice %261 {offsets = [0, 0], sizes = [5, 2], strides = [1, 1]} : vector<32x2xf32> to vector<5x2xf32>
    %c0_117 = arith.constant 0 : index
    %c0_118 = arith.constant 0 : index
    %263 = vector.load %arg6[%c0_117, %c0_118] : memref<5x2xf32, #tpu.memory_space<vmem>>, vector<5x2xf32>
    tpu.vector_store %arg6[%c0_117, %c0_118], %262 {strides = array<i32>} : memref<5x2xf32, #tpu.memory_space<vmem>>, vector<5x2xf32>,
    return
  }
  func.func @transform_0(%arg0: i32) -> (i32, i32) {
    %c0_i32 = arith.constant 0 : i32
    %c0_i32_0 = arith.constant 0 : i32
    %c0_i32_1 = arith.constant 0 : i32
    return %c0_i32, %c0_i32_0 : i32, i32
  }
  func.func @transform_1(%arg0: i32) -> (i32, i32, i32) {
    %c0_i32 = arith.constant 0 : i32
    %c0_i32_0 = arith.constant 0 : i32
    %c0_i32_1 = arith.constant 0 : i32
    %c0_i32_2 = arith.constant 0 : i32
    return %c0_i32, %c0_i32_0, %c0_i32_1 : i32, i32, i32
  }
  func.func @transform_2(%arg0: i32) -> (i32, i32) {
    %c0_i32 = arith.constant 0 : i32
    %c0_i32_0 = arith.constant 0 : i32
    %c0_i32_1 = arith.constant 0 : i32
    return %c0_i32, %c0_i32_0 : i32, i32
  }
  func.func @transform_3(%arg0: i32) -> (i32, i32, i32) {
    %c0_i32 = arith.constant 0 : i32
    %c0_i32_0 = arith.constant 0 : i32
    %c0_i32_1 = arith.constant 0 : i32
    %c0_i32_2 = arith.constant 0 : i32
    return %c0_i32, %c0_i32_0, %c0_i32_1 : i32, i32, i32
  }
  func.func @transform_4(%arg0: i32) -> (i32, i32) {
    %c0_i32 = arith.constant 0 : i32
    %c0_i32_0 = arith.constant 0 : i32
    %c0_i32_1 = arith.constant 0 : i32
    return %c0_i32, %c0_i32_0 : i32, i32
  }
  func.func @transform_5(%arg0: i32) -> (i32, i32) {
    %c0_i32 = arith.constant 0 : i32
    %c0_i32_0 = arith.constant 0 : i32
    %c0_i32_1 = arith.constant 0 : i32
    return %c0_i32, %c0_i32_0 : i32, i32
  }
}

</mosaic_0001>

<llo_original>
// kernel: tcn_classifier_forward.1
$region0: #{tcn_classifier_forward.1}
  #allocation0 [shape = 'u32[]', space=smem, size = 0x4, offset = 0x4, fixed_abs, tag = 'smem constant byte address 0x4 - core index']
  #allocation1 [shape = 'u32[144,128]{1,0:T(1,128)}', space=vmem, size = 0x12000, scoped, tag = 'internal scratch']
  #allocation2 [shape = 'f32[16,56]{1,0:T(8,128)}', space=vmem, size = 0x2000, scoped, tag = 'scratch operand']
  %s0 = inlined_call_operand.vmem [shape: f32[16,56], index: 0, kind: input, shape index: {}]
  %s1 = inlined_call_operand.vmem [shape: bf16[20,16,16], index: 1, kind: input, shape index: {}]
  %s2 = inlined_call_operand.vmem [shape: f32[16,8], index: 2, kind: input, shape index: {}]
  %s3 = inlined_call_operand.vmem [shape: bf16[3,32,32], index: 3, kind: input, shape index: {}]
  %s4 = inlined_call_operand.vmem [shape: f32[32,3], index: 4, kind: input, shape index: {}]
  %s5 = inlined_call_operand.vmem [shape: f32[5,2], index: 5, kind: output, shape index: {}]
  %s6 = sld [smem:[#allocation0]]
  $region30: #{tcn_classifier_forward.1} parent=0
    _
  %s8 = ssub.s32 1, %s6
  %s9 = scalar_select 0, %s8, %s6
  // Predicated region
  $region2: #{tcn_classifier_forward.1} parent=0 // pred_check
    _
  $region3: #{tcn_classifier_forward.1} parent=0 // pred_check_branch
    %11 = sbr.rel (0) target = $region5
  $region4: #{tcn_classifier_forward.1} parent=0 // pred_region
    _
  $region5: #{tcn_classifier_forward.1} parent=0 // pred_fallthru
    _
  // Predicated region
  $region6: #{tcn_classifier_forward.1} parent=0 // pred_check
    _
  $region7: #{tcn_classifier_forward.1} parent=0 // pred_check_branch
    %13 = sbr.rel (0) target = $region9
  $region8: #{tcn_classifier_forward.1} parent=0 // pred_region
    _
  $region9: #{tcn_classifier_forward.1} parent=0 // pred_fallthru
    _
  // Predicated region
  $region10: #{tcn_classifier_forward.1} parent=0 // pred_check
    _
  $region11: #{tcn_classifier_forward.1} parent=0 // pred_check_branch
    %15 = sbr.rel (0) target = $region13
  $region12: #{tcn_classifier_forward.1} parent=0 // pred_region
    _
  $region13: #{tcn_classifier_forward.1} parent=0 // pred_fallthru
    _
  // Predicated region
  $region14: #{tcn_classifier_forward.1} parent=0 // pred_check
    _
  $region15: #{tcn_classifier_forward.1} parent=0 // pred_check_branch
    %17 = sbr.rel (0) target = $region17
  $region16: #{tcn_classifier_forward.1} parent=0 // pred_region
    _
  $region17: #{tcn_classifier_forward.1} parent=0 // pred_fallthru
    _
  // Predicated region
  $region18: #{tcn_classifier_forward.1} parent=0 // pred_check
    _
  $region19: #{tcn_classifier_forward.1} parent=0 // pred_check_branch
    %19 = sbr.rel (0) target = $region21
  $region20: #{tcn_classifier_forward.1} parent=0 // pred_region
    _
  $region21: #{tcn_classifier_forward.1} parent=0 // pred_fallthru
    _
  %v21 = vlaneseq
  %v22 = vand.u32 %v21, 127
  %vm23 = vcmp.lt.s32.totalorder %v22, 0
  %vm24 = vcmp.ge.s32.totalorder %v22, 8
  %vm25 = vcmp.lt.s32.totalorder %v22, 24
  %vm26 = vmand %vm24, %vm25
  %vm27 = vmor %vm23, %vm26
  %vm28 = vcmp.ge.s32.totalorder %v22, 32
  %vm29 = vcmp.lt.s32.totalorder %v22, 48
  %vm30 = vmand %vm28, %vm29
  %vm31 = vmor %vm27, %vm30
  %v32 = vsel %vm31, 1, 0
  %v33 = vcvt.s32.f32 %v32
  %vm34 = vcmask 64512
  %35 = vst.msk [vmem:[#allocation2] sm:$0xff] %vm34, 0.0
  %36 = vst.msk [vmem:[#allocation2 + $0x8] sm:$0xff] %vm34, 0.0
  %v37 = vld [vmem:[%s2] sm:$0xff]
  %v38 = vld [vmem:[%s2 + $0x8] sm:$0xff]
  %v39 = vld [vmem:[%s0] sm:$0xff]
  %v40 = vld [vmem:[%s0 + $0x8] sm:$0xff]
  %v41 = vpack.c.bf16 %v40, %v39
  %v42 = vld [vmem:[%s1] sm:$0xf]
  %v43 = vld [vmem:[%s1 + $0x4] sm:$0xf]
  %s44 = scalar_lea.vmem %s1, 8
  %v45 = vld [vmem:[%s44] sm:$0xf]
  %v46 = vld [vmem:[%s44 + $0x4] sm:$0xf]
  %v49 = vunpack.c.l.b16 %v45
  %v50 = vunpack.c.l.b16 %v46
  %v51 = vpack.c.b16 %v50, %v49
  %53 = vrot.lane.b32.xlu0 %v41, 121
  %v54 = vpop.permute.xlu0 %53
  %vm56 = vcmask 130048
  %v58 = vsel %vm56, %v51, 0
  %60 = vmatprep.subr.bf16.mxu0 0
  %61 = vmatpush1.bf16.msra.mxu0 %v54
  %62 = vmatprep.subr.bf16.mxu0 0
  %63 = vmatpush1.bf16.msra.mxu0 0
  %64 = vmatprep.subr.bf16.mxu0 0
  %65 = vmatpush1.bf16.msra.mxu0 0
  %66 = vmatprep.subr.bf16.mxu0 0
  %67 = vmatpush1.bf16.msra.mxu0 0
  %68 = vmatprep.subr.bf16.mxu0 0
  %69 = vmatpush1.bf16.msra.mxu0 0
  %70 = vmatprep.subr.bf16.mxu0 0
  %71 = vmatpush1.bf16.msra.mxu0 0
  %72 = vmatprep.subr.bf16.mxu0 0
  %73 = vmatpush1.bf16.msra.mxu0 0
  %74 = vmatprep.subr.bf16.mxu0 0
  %75 = vmatpush1.bf16.msra.mxu0 0
  %76 = vmatprep.subr.bf16.mxu0 0
  %77 = vmatpush1.bf16.msra.mxu0 0
  %78 = vmatprep.subr.bf16.mxu0 0
  %79 = vmatpush1.bf16.msra.mxu0 0
  %80 = vmatprep.subr.bf16.mxu0 0
  %81 = vmatpush1.bf16.msra.mxu0 0
  %82 = vmatprep.subr.bf16.mxu0 0
  %83 = vmatpush1.bf16.msra.mxu0 0
  %84 = vmatprep.subr.bf16.mxu0 0
  %85 = vmatpush1.bf16.msra.mxu0 0
  %86 = vmatprep.subr.bf16.mxu0 0
  %87 = vmatpush1.bf16.msra.mxu0 0
  %88 = vmatprep.subr.bf16.mxu0 0
  %89 = vmatpush1.bf16.msra.mxu0 0
  %90 = vmatprep.subr.bf16.mxu0 0
  %91 = vmatpush1.bf16.msra.mxu0 0
  %92 = vmatprep.mubr.bf16.mxu0 0
  %93 = vmatmul.mubr.bf16.gmra.mrb[0].mxu0 %v58
  %v94 = vpop.f32.mrb[0].mxu0
  %v95 = vadd.f32 0.0, %v94
  %v96 = vpop.f32.mrb[0].mxu0
  %v97 = vpop.f32.mrb[0].mxu0
  %v98 = vadd.f32 0.0, %v97
  %v99 = vpop.f32.mrb[0].mxu0
  %100 = vdwg.mxu0
  %v103 = vunpack.c.l.b16 %v42
  %v104 = vunpack.c.l.b16 %v43
  %v105 = vpack.c.b16 %v104, %v103
  %106 = vrot.lane.b32.xlu0 %v41, 122
  %v107 = vpop.permute.xlu0 %106
  %v110 = vsel %vm56, %v105, 0
  %112 = vmatprep.subr.bf16.mxu0 0
  %113 = vmatpush1.bf16.msra.mxu0 %v107
  %114 = vmatprep.subr.bf16.mxu0 0
  %115 = vmatpush1.bf16.msra.mxu0 0
  %116 = vmatprep.subr.bf16.mxu0 0
  %117 = vmatpush1.bf16.msra.mxu0 0
  %118 = vmatprep.subr.bf16.mxu0 0
  %119 = vmatpush1.bf16.msra.mxu0 0
  %120 = vmatprep.subr.bf16.mxu0 0
  %121 = vmatpush1.bf16.msra.mxu0 0
  %122 = vmatprep.subr.bf16.mxu0 0
  %123 = vmatpush1.bf16.msra.mxu0 0
  %124 = vmatprep.subr.bf16.mxu0 0
  %125 = vmatpush1.bf16.msra.mxu0 0
  %126 = vmatprep.subr.bf16.mxu0 0
  %127 = vmatpush1.bf16.msra.mxu0 0
  %128 = vmatprep.subr.bf16.mxu0 0
  %129 = vmatpush1.bf16.msra.mxu0 0
  %130 = vmatprep.subr.bf16.mxu0 0
  %131 = vmatpush1.bf16.msra.mxu0 0
  %132 = vmatprep.subr.bf16.mxu0 0
  %133 = vmatpush1.bf16.msra.mxu0 0
  %134 = vmatprep.subr.bf16.mxu0 0
  %135 = vmatpush1.bf16.msra.mxu0 0
  %136 = vmatprep.subr.bf16.mxu0 0
  %137 = vmatpush1.bf16.msra.mxu0 0
  %138 = vmatprep.subr.bf16.mxu0 0
  %139 = vmatpush1.bf16.msra.mxu0 0
  %140 = vmatprep.subr.bf16.mxu0 0
  %141 = vmatpush1.bf16.msra.mxu0 0
  %142 = vmatprep.subr.bf16.mxu0 0
  %143 = vmatpush1.bf16.msra.mxu0 0
  %144 = vmatprep.mubr.bf16.mxu0 0
  %145 = vmatmul.mubr.bf16.gmra.mrb[0].mxu0 %v110
  %v146 = vpop.f32.mrb[0].mxu0
  %v147 = vadd.f32 %v95, %v146
  %v148 = vpop.f32.mrb[0].mxu0
  %v149 = vpop.f32.mrb[0].mxu0
  %v150 = vadd.f32 %v98, %v149
  %v151 = vpop.f32.mrb[0].mxu0
  %152 = vdwg.mxu0
  %s153 = scalar_lea.vmem %s1, 16
  %v154 = vld [vmem:[%s153] sm:$0xf]
  %v155 = vld [vmem:[%s153 + $0x4] sm:$0xf]
  %v158 = vunpack.c.l.b16 %v154
  %v159 = vunpack.c.l.b16 %v155
  %v160 = vpack.c.b16 %v159, %v158
  %161 = vrot.lane.b32.xlu0 %v41, 120
  %v162 = vpop.permute.xlu0 %161
  %v165 = vsel %vm56, %v160, 0
  %167 = vmatprep.subr.bf16.mxu0 0
  %168 = vmatpush1.bf16.msra.mxu0 %v162
  %169 = vmatprep.subr.bf16.mxu0 0
  %170 = vmatpush1.bf16.msra.mxu0 0
  %171 = vmatprep.subr.bf16.mxu0 0
  %172 = vmatpush1.bf16.msra.mxu0 0
  %173 = vmatprep.subr.bf16.mxu0 0
  %174 = vmatpush1.bf16.msra.mxu0 0
  %175 = vmatprep.subr.bf16.mxu0 0
  %176 = vmatpush1.bf16.msra.mxu0 0
  %177 = vmatprep.subr.bf16.mxu0 0
  %178 = vmatpush1.bf16.msra.mxu0 0
  %179 = vmatprep.subr.bf16.mxu0 0
  %180 = vmatpush1.bf16.msra.mxu0 0
  %181 = vmatprep.subr.bf16.mxu0 0
  %182 = vmatpush1.bf16.msra.mxu0 0
  %183 = vmatprep.subr.bf16.mxu0 0
  %184 = vmatpush1.bf16.msra.mxu0 0
  %185 = vmatprep.subr.bf16.mxu0 0
  %186 = vmatpush1.bf16.msra.mxu0 0
  %187 = vmatprep.subr.bf16.mxu0 0
  %188 = vmatpush1.bf16.msra.mxu0 0
  %189 = vmatprep.subr.bf16.mxu0 0
  %190 = vmatpush1.bf16.msra.mxu0 0
  %191 = vmatprep.subr.bf16.mxu0 0
  %192 = vmatpush1.bf16.msra.mxu0 0
  %193 = vmatprep.subr.bf16.mxu0 0
  %194 = vmatpush1.bf16.msra.mxu0 0
  %195 = vmatprep.subr.bf16.mxu0 0
  %196 = vmatpush1.bf16.msra.mxu0 0
  %197 = vmatprep.subr.bf16.mxu0 0
  %198 = vmatpush1.bf16.msra.mxu0 0
  %199 = vmatprep.mubr.bf16.mxu0 0
  %200 = vmatmul.mubr.bf16.gmra.mrb[0].mxu0 %v165
  %v201 = vpop.f32.mrb[0].mxu0
  %v202 = vadd.f32 0.0, %v201
  %v203 = vpop.f32.mrb[0].mxu0
  %v204 = vpop.f32.mrb[0].mxu0
  %v205 = vadd.f32 0.0, %v204
  %v206 = vpop.f32.mrb[0].mxu0
  %207 = vdwg.mxu0
  %v208 = vadd.f32 %v147, %v202
  %v209 = vadd.f32 %v150, %v205
  %211 = vset.pattern.permute.xlu0 0
  %212 = vperm.xlu0 %211, %v37
  %v213 = vpop.permute.xlu0 %212
  %216 = vset.pattern.permute.xlu0 0
  %217 = vperm.xlu0 %216, %v38
  %v218 = vpop.permute.xlu0 %217
  %v220 = vadd.f32 %v208, %v213
  %v221 = vadd.f32 %v209, %v218
  %vm222 = vcmp.gt.f32.partialorder %v220, 0.0
  %vm223 = vcmp.gt.f32.partialorder %v221, 0.0
  %v224 = vmul.f32 %v220, 0.01
  %v225 = vmul.f32 %v221, 0.01
  %v226 = vsel %vm222, %v220, %v224
  %v227 = vsel %vm223, %v221, %v225
  %v228 = vmul.f32 %v226, %v33
  %v229 = vmul.f32 %v227, %v33
  %232 = vrot.lane.b32.xlu0 %v228, 8
  %v233 = vpop.permute.xlu0 %232
  %234 = vrot.lane.b32.xlu0 %v229, 8
  %v235 = vpop.permute.xlu0 %234
  %vm238 = vcmask 457792
  %239 = vst.msk [vmem:[#allocation2] sm:$0xff] %vm238, %v233
  %240 = vst.msk [vmem:[#allocation2 + $0x8] sm:$0xff] %vm238, %v235
  %v241 = vld [vmem:[#allocation2] sm:$0xff]
  %v242 = vld [vmem:[#allocation2 + $0x8] sm:$0xff]
  %v243 = vpack.c.bf16 %v242, %v241
  %s244 = scalar_lea.vmem %s1, 24
  %v245 = vld [vmem:[%s244] sm:$0xf]
  %v246 = vld [vmem:[%s244 + $0x4] sm:$0xf]
  %s247 = scalar_lea.vmem %s1, 32
  %v248 = vld [vmem:[%s247] sm:$0xf]
  %v249 = vld [vmem:[%s247 + $0x4] sm:$0xf]
  %v252 = vunpack.c.l.b16 %v248
  %v253 = vunpack.c.l.b16 %v249
  %v254 = vpack.c.b16 %v253, %v252
  %256 = vrot.lane.b32.xlu0 %v243, 121
  %v257 = vpop.permute.xlu0 %256
  %v260 = vsel %vm56, %v254, 0
  %262 = vmatprep.subr.bf16.mxu0 0
  %263 = vmatpush1.bf16.msra.mxu0 %v257
  %264 = vmatprep.subr.bf16.mxu0 0
  %265 = vmatpush1.bf16.msra.mxu0 0
  %266 = vmatprep.subr.bf16.mxu0 0
  %267 = vmatpush1.bf16.msra.mxu0 0
  %268 = vmatprep.subr.bf16.mxu0 0
  %269 = vmatpush1.bf16.msra.mxu0 0
  %270 = vmatprep.subr.bf16.mxu0 0
  %271 = vmatpush1.bf16.msra.mxu0 0
  %272 = vmatprep.subr.bf16.mxu0 0
  %273 = vmatpush1.bf16.msra.mxu0 0
  %274 = vmatprep.subr.bf16.mxu0 0
  %275 = vmatpush1.bf16.msra.mxu0 0
  %276 = vmatprep.subr.bf16.mxu0 0
  %277 = vmatpush1.bf16.msra.mxu0 0
  %278 = vmatprep.subr.bf16.mxu0 0
  %279 = vmatpush1.bf16.msra.mxu0 0
  %280 = vmatprep.subr.bf16.mxu0 0
  %281 = vmatpush1.bf16.msra.mxu0 0
  %282 = vmatprep.subr.bf16.mxu0 0
  %283 = vmatpush1.bf16.msra.mxu0 0
  %284 = vmatprep.subr.bf16.mxu0 0
  %285 = vmatpush1.bf16.msra.mxu0 0
  %286 = vmatprep.subr.bf16.mxu0 0
  %287 = vmatpush1.bf16.msra.mxu0 0
  %288 = vmatprep.subr.bf16.mxu0 0
  %289 = vmatpush1.bf16.msra.mxu0 0
  %290 = vmatprep.subr.bf16.mxu0 0
  %291 = vmatpush1.bf16.msra.mxu0 0
  %292 = vmatprep.subr.bf16.mxu0 0
  %293 = vmatpush1.bf16.msra.mxu0 0
  %294 = vmatprep.mubr.bf16.mxu0 0
  %295 = vmatmul.mubr.bf16.gmra.mrb[0].mxu0 %v260
  %v296 = vpop.f32.mrb[0].mxu0
  %v297 = vadd.f32 0.0, %v296
  %v298 = vpop.f32.mrb[0].mxu0
  %v299 = vpop.f32.mrb[0].mxu0
  %v300 = vadd.f32 0.0, %v299
  %v301 = vpop.f32.mrb[0].mxu0
  %302 = vdwg.mxu0
  %v305 = vunpack.c.l.b16 %v245
  %v306 = vunpack.c.l.b16 %v246
  %v307 = vpack.c.b16 %v306, %v305
  %308 = vrot.lane.b32.xlu0 %v243, 122
  %v309 = vpop.permute.xlu0 %308
  %v312 = vsel %vm56, %v307, 0
  %314 = vmatprep.subr.bf16.mxu0 0
  %315 = vmatpush1.bf16.msra.mxu0 %v309
  %316 = vmatprep.subr.bf16.mxu0 0
  %317 = vmatpush1.bf16.msra.mxu0 0
  %318 = vmatprep.subr.bf16.mxu0 0
  %319 = vmatpush1.bf16.msra.mxu0 0
  %320 = vmatprep.subr.bf16.mxu0 0
  %321 = vmatpush1.bf16.msra.mxu0 0
  %322 = vmatprep.subr.bf16.mxu0 0
  %323 = vmatpush1.bf16.msra.mxu0 0
  %324 = vmatprep.subr.bf16.mxu0 0
  %325 = vmatpush1.bf16.msra.mxu0 0
  %326 = vmatprep.subr.bf16.mxu0 0
  %327 = vmatpush1.bf16.msra.mxu0 0
  %328 = vmatprep.subr.bf16.mxu0 0
  %329 = vmatpush1.bf16.msra.mxu0 0
  %330 = vmatprep.subr.bf16.mxu0 0
  %331 = vmatpush1.bf16.msra.mxu0 0
  %332 = vmatprep.subr.bf16.mxu0 0
  %333 = vmatpush1.bf16.msra.mxu0 0
  %334 = vmatprep.subr.bf16.mxu0 0
  %335 = vmatpush1.bf16.msra.mxu0 0
  %336 = vmatprep.subr.bf16.mxu0 0
  %337 = vmatpush1.bf16.msra.mxu0 0
  %338 = vmatprep.subr.bf16.mxu0 0
  %339 = vmatpush1.bf16.msra.mxu0 0
  %340 = vmatprep.subr.bf16.mxu0 0
  %341 = vmatpush1.bf16.msra.mxu0 0
  %342 = vmatprep.subr.bf16.mxu0 0
  %343 = vmatpush1.bf16.msra.mxu0 0
  %344 = vmatprep.subr.bf16.mxu0 0
  %345 = vmatpush1.bf16.msra.mxu0 0
  %346 = vmatprep.mubr.bf16.mxu0 0
  %347 = vmatmul.mubr.bf16.gmra.mrb[0].mxu0 %v312
  %v348 = vpop.f32.mrb[0].mxu0
  %v349 = vadd.f32 %v297, %v348
  %v350 = vpop.f32.mrb[0].mxu0
  %v351 = vpop.f32.mrb[0].mxu0
  %v352 = vadd.f32 %v300, %v351
  %v353 = vpop.f32.mrb[0].mxu0
  %354 = vdwg.mxu0
  %s355 = scalar_lea.vmem %s1, 40
  %v356 = vld [vmem:[%s355] sm:$0xf]
  %v357 = vld [vmem:[%s355 + $0x4] sm:$0xf]
  %v360 = vunpack.c.l.b16 %v356
  %v361 = vunpack.c.l.b16 %v357
  %v362 = vpack.c.b16 %v361, %v360
  %363 = vrot.lane.b32.xlu0 %v243, 120
  %v364 = vpop.permute.xlu0 %363
  %v367 = vsel %vm56, %v362, 0
  %369 = vmatprep.subr.bf16.mxu0 0
  %370 = vmatpush1.bf16.msra.mxu0 %v364
  %371 = vmatprep.subr.bf16.mxu0 0
  %372 = vmatpush1.bf16.msra.mxu0 0
  %373 = vmatprep.subr.bf16.mxu0 0
  %374 = vmatpush1.bf16.msra.mxu0 0
  %375 = vmatprep.subr.bf16.mxu0 0
  %376 = vmatpush1.bf16.msra.mxu0 0
  %377 = vmatprep.subr.bf16.mxu0 0
  %378 = vmatpush1.bf16.msra.mxu0 0
  %379 = vmatprep.subr.bf16.mxu0 0
  %380 = vmatpush1.bf16.msra.mxu0 0
  %381 = vmatprep.subr.bf16.mxu0 0
  %382 = vmatpush1.bf16.msra.mxu0 0
  %383 = vmatprep.subr.bf16.mxu0 0
  %384 = vmatpush1.bf16.msra.mxu0 0
  %385 = vmatprep.subr.bf16.mxu0 0
  %386 = vmatpush1.bf16.msra.mxu0 0
  %387 = vmatprep.subr.bf16.mxu0 0
  %388 = vmatpush1.bf16.msra.mxu0 0
  %389 = vmatprep.subr.bf16.mxu0 0
  %390 = vmatpush1.bf16.msra.mxu0 0
  %391 = vmatprep.subr.bf16.mxu0 0
  %392 = vmatpush1.bf16.msra.mxu0 0
  %393 = vmatprep.subr.bf16.mxu0 0
  %394 = vmatpush1.bf16.msra.mxu0 0
  %395 = vmatprep.subr.bf16.mxu0 0
  %396 = vmatpush1.bf16.msra.mxu0 0
  %397 = vmatprep.subr.bf16.mxu0 0
  %398 = vmatpush1.bf16.msra.mxu0 0
  %399 = vmatprep.subr.bf16.mxu0 0
  %400 = vmatpush1.bf16.msra.mxu0 0
  %401 = vmatprep.mubr.bf16.mxu0 0
  %402 = vmatmul.mubr.bf16.gmra.mrb[0].mxu0 %v367
  %v403 = vpop.f32.mrb[0].mxu0
  %v404 = vadd.f32 0.0, %v403
  %v405 = vpop.f32.mrb[0].mxu0
  %v406 = vpop.f32.mrb[0].mxu0
  %v407 = vadd.f32 0.0, %v406
  %v408 = vpop.f32.mrb[0].mxu0
  %409 = vdwg.mxu0
  %v410 = vadd.f32 %v349, %v404
  %v411 = vadd.f32 %v352, %v407
  %412 = vset.pattern.permute.xlu0 1
  %413 = vperm.xlu0 %412, %v37
  %v414 = vpop.permute.xlu0 %413
  %416 = vset.pattern.permute.xlu0 1
  %417 = vperm.xlu0 %416, %v38
  %v418 = vpop.permute.xlu0 %417
  %v420 = vadd.f32 %v410, %v414
  %v421 = vadd.f32 %v411, %v418
  %vm422 = vcmp.gt.f32.partialorder %v420, 0.0
  %vm423 = vcmp.gt.f32.partialorder %v421, 0.0
  %v424 = vmul.f32 %v420, 0.01
  %v425 = vmul.f32 %v421, 0.01
  %v426 = vsel %vm422, %v420, %v424
  %v427 = vsel %vm423, %v421, %v425
  %s428 = scalar_lea.vmem %s1, 48
  %v429 = vld [vmem:[%s428] sm:$0xf]
  %v430 = vld [vmem:[%s428 + $0x4] sm:$0xf]
  %431 = vset.pattern.permute.xlu0 2
  %432 = vperm.xlu0 %431, %v37
  %v433 = vpop.permute.xlu0 %432
  %435 = vset.pattern.permute.xlu0 2
  %436 = vperm.xlu0 %435, %v38
  %v437 = vpop.permute.xlu0 %436
  %v441 = vunpack.c.l.b16 %v429
  %v442 = vunpack.c.l.b16 %v430
  %v443 = vpack.c.b16 %v442, %v441
  %v445 = vsel %vm56, %v443, 0
  %447 = vmatprep.subr.bf16.mxu0 0
  %448 = vmatpush1.bf16.msra.mxu0 %v162
  %449 = vmatprep.subr.bf16.mxu0 0
  %450 = vmatpush1.bf16.msra.mxu0 0
  %451 = vmatprep.subr.bf16.mxu0 0
  %452 = vmatpush1.bf16.msra.mxu0 0
  %453 = vmatprep.subr.bf16.mxu0 0
  %454 = vmatpush1.bf16.msra.mxu0 0
  %455 = vmatprep.subr.bf16.mxu0 0
  %456 = vmatpush1.bf16.msra.mxu0 0
  %457 = vmatprep.subr.bf16.mxu0 0
  %458 = vmatpush1.bf16.msra.mxu0 0
  %459 = vmatprep.subr.bf16.mxu0 0
  %460 = vmatpush1.bf16.msra.mxu0 0
  %461 = vmatprep.subr.bf16.mxu0 0
  %462 = vmatpush1.bf16.msra.mxu0 0
  %463 = vmatprep.subr.bf16.mxu0 0
  %464 = vmatpush1.bf16.msra.mxu0 0
  %465 = vmatprep.subr.bf16.mxu0 0
  %466 = vmatpush1.bf16.msra.mxu0 0
  %467 = vmatprep.subr.bf16.mxu0 0
  %468 = vmatpush1.bf16.msra.mxu0 0
  %469 = vmatprep.subr.bf16.mxu0 0
  %470 = vmatpush1.bf16.msra.mxu0 0
  %471 = vmatprep.subr.bf16.mxu0 0
  %472 = vmatpush1.bf16.msra.mxu0 0
  %473 = vmatprep.subr.bf16.mxu0 0
  %474 = vmatpush1.bf16.msra.mxu0 0
  %475 = vmatprep.subr.bf16.mxu0 0
  %476 = vmatpush1.bf16.msra.mxu0 0
  %477 = vmatprep.subr.bf16.mxu0 0
  %478 = vmatpush1.bf16.msra.mxu0 0
  %479 = vmatprep.mubr.bf16.mxu0 0
  %480 = vmatmul.mubr.bf16.gmra.mrb[0].mxu0 %v445
  %v481 = vpop.f32.mrb[0].mxu0
  %v482 = vadd.f32 %v433, %v481
  %v483 = vpop.f32.mrb[0].mxu0
  %v484 = vpop.f32.mrb[0].mxu0
  %v485 = vadd.f32 %v437, %v484
  %v486 = vpop.f32.mrb[0].mxu0
  %487 = vdwg.mxu0
  %v488 = vadd.f32 %v426, %v482
  %v489 = vadd.f32 %v427, %v485
  %v490 = vmul.f32 %v488, %v33
  %v491 = vmul.f32 %v489, %v33
  %494 = vrot.lane.b32.xlu0 %v490, 8
  %v495 = vpop.permute.xlu0 %494
  %496 = vrot.lane.b32.xlu0 %v491, 8
  %v497 = vpop.permute.xlu0 %496
  %500 = vst.msk [vmem:[#allocation2] sm:$0xff] %vm238, %v495
  %501 = vst.msk [vmem:[#allocation2 + $0x8] sm:$0xff] %vm238, %v497
  %v502 = vld [vmem:[#allocation2] sm:$0xff]
  %v503 = vld [vmem:[#allocation2 + $0x8] sm:$0xff]
  %v504 = vpack.c.bf16 %v503, %v502
  %s505 = scalar_lea.vmem %s1, 56
  %v506 = vld [vmem:[%s505] sm:$0xf]
  %v507 = vld [vmem:[%s505 + $0x4] sm:$0xf]
  %s508 = scalar_lea.vmem %s1, 64
  %v509 = vld [vmem:[%s508] sm:$0xf]
  %v510 = vld [vmem:[%s508 + $0x4] sm:$0xf]
  %v513 = vunpack.c.l.b16 %v509
  %v514 = vunpack.c.l.b16 %v510
  %v515 = vpack.c.b16 %v514, %v513
  %517 = vrot.lane.b32.xlu0 %v504, 122
  %v518 = vpop.permute.xlu0 %517
  %v521 = vsel %vm56, %v515, 0
  %523 = vmatprep.subr.bf16.mxu0 0
  %524 = vmatpush1.bf16.msra.mxu0 %v518
  %525 = vmatprep.subr.bf16.mxu0 0
  %526 = vmatpush1.bf16.msra.mxu0 0
  %527 = vmatprep.subr.bf16.mxu0 0
  %528 = vmatpush1.bf16.msra.mxu0 0
  %529 = vmatprep.subr.bf16.mxu0 0
  %530 = vmatpush1.bf16.msra.mxu0 0
  %531 = vmatprep.subr.bf16.mxu0 0
  %532 = vmatpush1.bf16.msra.mxu0 0
  %533 = vmatprep.subr.bf16.mxu0 0
  %534 = vmatpush1.bf16.msra.mxu0 0
  %535 = vmatprep.subr.bf16.mxu0 0
  %536 = vmatpush1.bf16.msra.mxu0 0
  %537 = vmatprep.subr.bf16.mxu0 0
  %538 = vmatpush1.bf16.msra.mxu0 0
  %539 = vmatprep.subr.bf16.mxu0 0
  %540 = vmatpush1.bf16.msra.mxu0 0
  %541 = vmatprep.subr.bf16.mxu0 0
  %542 = vmatpush1.bf16.msra.mxu0 0
  %543 = vmatprep.subr.bf16.mxu0 0
  %544 = vmatpush1.bf16.msra.mxu0 0
  %545 = vmatprep.subr.bf16.mxu0 0
  %546 = vmatpush1.bf16.msra.mxu0 0
  %547 = vmatprep.subr.bf16.mxu0 0
  %548 = vmatpush1.bf16.msra.mxu0 0
  %549 = vmatprep.subr.bf16.mxu0 0
  %550 = vmatpush1.bf16.msra.mxu0 0
  %551 = vmatprep.subr.bf16.mxu0 0
  %552 = vmatpush1.bf16.msra.mxu0 0
  %553 = vmatprep.subr.bf16.mxu0 0
  %554 = vmatpush1.bf16.msra.mxu0 0
  %555 = vmatprep.mubr.bf16.mxu0 0
  %556 = vmatmul.mubr.bf16.gmra.mrb[0].mxu0 %v521
  %v557 = vpop.f32.mrb[0].mxu0
  %v558 = vadd.f32 0.0, %v557
  %v559 = vpop.f32.mrb[0].mxu0
  %v560 = vpop.f32.mrb[0].mxu0
  %v561 = vadd.f32 0.0, %v560
  %v562 = vpop.f32.mrb[0].mxu0
  %563 = vdwg.mxu0
  %v566 = vunpack.c.l.b16 %v506
  %v567 = vunpack.c.l.b16 %v507
  %v568 = vpack.c.b16 %v567, %v566
  %569 = vrot.lane.b32.xlu0 %v504, 124
  %v570 = vpop.permute.xlu0 %569
  %v573 = vsel %vm56, %v568, 0
  %575 = vmatprep.subr.bf16.mxu0 0
  %576 = vmatpush1.bf16.msra.mxu0 %v570
  %577 = vmatprep.subr.bf16.mxu0 0
  %578 = vmatpush1.bf16.msra.mxu0 0
  %579 = vmatprep.subr.bf16.mxu0 0
  %580 = vmatpush1.bf16.msra.mxu0 0
  %581 = vmatprep.subr.bf16.mxu0 0
  %582 = vmatpush1.bf16.msra.mxu0 0
  %583 = vmatprep.subr.bf16.mxu0 0
  %584 = vmatpush1.bf16.msra.mxu0 0
  %585 = vmatprep.subr.bf16.mxu0 0
  %586 = vmatpush1.bf16.msra.mxu0 0
  %587 = vmatprep.subr.bf16.mxu0 0
  %588 = vmatpush1.bf16.msra.mxu0 0
  %589 = vmatprep.subr.bf16.mxu0 0
  %590 = vmatpush1.bf16.msra.mxu0 0
  %591 = vmatprep.subr.bf16.mxu0 0
  %592 = vmatpush1.bf16.msra.mxu0 0
  %593 = vmatprep.subr.bf16.mxu0 0
  %594 = vmatpush1.bf16.msra.mxu0 0
  %595 = vmatprep.subr.bf16.mxu0 0
  %596 = vmatpush1.bf16.msra.mxu0 0
  %597 = vmatprep.subr.bf16.mxu0 0
  %598 = vmatpush1.bf16.msra.mxu0 0
  %599 = vmatprep.subr.bf16.mxu0 0
  %600 = vmatpush1.bf16.msra.mxu0 0
  %601 = vmatprep.subr.bf16.mxu0 0
  %602 = vmatpush1.bf16.msra.mxu0 0
  %603 = vmatprep.subr.bf16.mxu0 0
  %604 = vmatpush1.bf16.msra.mxu0 0
  %605 = vmatprep.subr.bf16.mxu0 0
  %606 = vmatpush1.bf16.msra.mxu0 0
  %607 = vmatprep.mubr.bf16.mxu0 0
  %608 = vmatmul.mubr.bf16.gmra.mrb[0].mxu0 %v573
  %v609 = vpop.f32.mrb[0].mxu0
  %v610 = vadd.f32 %v558, %v609
  %v611 = vpop.f32.mrb[0].mxu0
  %v612 = vpop.f32.mrb[0].mxu0
  %v613 = vadd.f32 %v561, %v612
  %v614 = vpop.f32.mrb[0].mxu0
  %615 = vdwg.mxu0
  %s616 = scalar_lea.vmem %s1, 72
  %v617 = vld [vmem:[%s616] sm:$0xf]
  %v618 = vld [vmem:[%s616 + $0x4] sm:$0xf]
  %v621 = vunpack.c.l.b16 %v617
  %v622 = vunpack.c.l.b16 %v618
  %v623 = vpack.c.b16 %v622, %v621
  %624 = vrot.lane.b32.xlu0 %v504, 120
  %v625 = vpop.permute.xlu0 %624
  %v628 = vsel %vm56, %v623, 0
  %630 = vmatprep.subr.bf16.mxu0 0
  %631 = vmatpush1.bf16.msra.mxu0 %v625
  %632 = vmatprep.subr.bf16.mxu0 0
  %633 = vmatpush1.bf16.msra.mxu0 0
  %634 = vmatprep.subr.bf16.mxu0 0
  %635 = vmatpush1.bf16.msra.mxu0 0
  %636 = vmatprep.subr.bf16.mxu0 0
  %637 = vmatpush1.bf16.msra.mxu0 0
  %638 = vmatprep.subr.bf16.mxu0 0
  %639 = vmatpush1.bf16.msra.mxu0 0
  %640 = vmatprep.subr.bf16.mxu0 0
  %641 = vmatpush1.bf16.msra.mxu0 0
  %642 = vmatprep.subr.bf16.mxu0 0
  %643 = vmatpush1.bf16.msra.mxu0 0
  %644 = vmatprep.subr.bf16.mxu0 0
  %645 = vmatpush1.bf16.msra.mxu0 0
  %646 = vmatprep.subr.bf16.mxu0 0
  %647 = vmatpush1.bf16.msra.mxu0 0
  %648 = vmatprep.subr.bf16.mxu0 0
  %649 = vmatpush1.bf16.msra.mxu0 0
  %650 = vmatprep.subr.bf16.mxu0 0
  %651 = vmatpush1.bf16.msra.mxu0 0
  %652 = vmatprep.subr.bf16.mxu0 0
  %653 = vmatpush1.bf16.msra.mxu0 0
  %654 = vmatprep.subr.bf16.mxu0 0
  %655 = vmatpush1.bf16.msra.mxu0 0
  %656 = vmatprep.subr.bf16.mxu0 0
  %657 = vmatpush1.bf16.msra.mxu0 0
  %658 = vmatprep.subr.bf16.mxu0 0
  %659 = vmatpush1.bf16.msra.mxu0 0
  %660 = vmatprep.subr.bf16.mxu0 0
  %661 = vmatpush1.bf16.msra.mxu0 0
  %662 = vmatprep.mubr.bf16.mxu0 0
  %663 = vmatmul.mubr.bf16.gmra.mrb[0].mxu0 %v628
  %v664 = vpop.f32.mrb[0].mxu0
  %v665 = vadd.f32 0.0, %v664
  %v666 = vpop.f32.mrb[0].mxu0
  %v667 = vpop.f32.mrb[0].mxu0
  %v668 = vadd.f32 0.0, %v667
  %v669 = vpop.f32.mrb[0].mxu0
  %670 = vdwg.mxu0
  %v671 = vadd.f32 %v610, %v665
  %v672 = vadd.f32 %v613, %v668
  %673 = vset.pattern.permute.xlu0 3
  %674 = vperm.xlu0 %673, %v37
  %v675 = vpop.permute.xlu0 %674
  %677 = vset.pattern.permute.xlu0 3
  %678 = vperm.xlu0 %677, %v38
  %v679 = vpop.permute.xlu0 %678
  %v681 = vadd.f32 %v671, %v675
  %v682 = vadd.f32 %v672, %v679
  %vm683 = vcmp.gt.f32.partialorder %v681, 0.0
  %vm684 = vcmp.gt.f32.partialorder %v682, 0.0
  %v685 = vmul.f32 %v681, 0.01
  %v686 = vmul.f32 %v682, 0.01
  %v687 = vsel %vm683, %v681, %v685
  %v688 = vsel %vm684, %v682, %v686
  %v689 = vmul.f32 %v687, %v33
  %v690 = vmul.f32 %v688, %v33
  %693 = vrot.lane.b32.xlu0 %v689, 8
  %v694 = vpop.permute.xlu0 %693
  %695 = vrot.lane.b32.xlu0 %v690, 8
  %v696 = vpop.permute.xlu0 %695
  %699 = vst.msk [vmem:[#allocation2] sm:$0xff] %vm238, %v694
  %700 = vst.msk [vmem:[#allocation2 + $0x8] sm:$0xff] %vm238, %v696
  %v701 = vld [vmem:[#allocation2] sm:$0xff]
  %v702 = vld [vmem:[#allocation2 + $0x8] sm:$0xff]
  %v703 = vpack.c.bf16 %v702, %v701
  %s704 = scalar_lea.vmem %s1, 80
  %v705 = vld [vmem:[%s704] sm:$0xf]
  %v706 = vld [vmem:[%s704 + $0x4] sm:$0xf]
  %s707 = scalar_lea.vmem %s1, 88
  %v708 = vld [vmem:[%s707] sm:$0xf]
  %v709 = vld [vmem:[%s707 + $0x4] sm:$0xf]
  %v712 = vunpack.c.l.b16 %v708
  %v713 = vunpack.c.l.b16 %v709
  %v714 = vpack.c.b16 %v713, %v712
  %716 = vrot.lane.b32.xlu0 %v703, 122
  %v717 = vpop.permute.xlu0 %716
  %v720 = vsel %vm56, %v714, 0
  %722 = vmatprep.subr.bf16.mxu0 0
  %723 = vmatpush1.bf16.msra.mxu0 %v717
  %724 = vmatprep.subr.bf16.mxu0 0
  %725 = vmatpush1.bf16.msra.mxu0 0
  %726 = vmatprep.subr.bf16.mxu0 0
  %727 = vmatpush1.bf16.msra.mxu0 0
  %728 = vmatprep.subr.bf16.mxu0 0
  %729 = vmatpush1.bf16.msra.mxu0 0
  %730 = vmatprep.subr.bf16.mxu0 0
  %731 = vmatpush1.bf16.msra.mxu0 0
  %732 = vmatprep.subr.bf16.mxu0 0
  %733 = vmatpush1.bf16.msra.mxu0 0
  %734 = vmatprep.subr.bf16.mxu0 0
  %735 = vmatpush1.bf16.msra.mxu0 0
  %736 = vmatprep.subr.bf16.mxu0 0
  %737 = vmatpush1.bf16.msra.mxu0 0
  %738 = vmatprep.subr.bf16.mxu0 0
  %739 = vmatpush1.bf16.msra.mxu0 0
  %740 = vmatprep.subr.bf16.mxu0 0
  %741 = vmatpush1.bf16.msra.mxu0 0
  %742 = vmatprep.subr.bf16.mxu0 0
  %743 = vmatpush1.bf16.msra.mxu0 0
  %744 = vmatprep.subr.bf16.mxu0 0
  %745 = vmatpush1.bf16.msra.mxu0 0
  %746 = vmatprep.subr.bf16.mxu0 0
  %747 = vmatpush1.bf16.msra.mxu0 0
  %748 = vmatprep.subr.bf16.mxu0 0
  %749 = vmatpush1.bf16.msra.mxu0 0
  %750 = vmatprep.subr.bf16.mxu0 0
  %751 = vmatpush1.bf16.msra.mxu0 0
  %752 = vmatprep.subr.bf16.mxu0 0
  %753 = vmatpush1.bf16.msra.mxu0 0
  %754 = vmatprep.mubr.bf16.mxu0 0
  %755 = vmatmul.mubr.bf16.gmra.mrb[0].mxu0 %v720
  %v756 = vpop.f32.mrb[0].mxu0
  %v757 = vadd.f32 0.0, %v756
  %v758 = vpop.f32.mrb[0].mxu0
  %v759 = vpop.f32.mrb[0].mxu0
  %v760 = vadd.f32 0.0, %v759
  %v761 = vpop.f32.mrb[0].mxu0
  %762 = vdwg.mxu0
  %v765 = vunpack.c.l.b16 %v705
  %v766 = vunpack.c.l.b16 %v706
  %v767 = vpack.c.b16 %v766, %v765
  %768 = vrot.lane.b32.xlu0 %v703, 124
  %v769 = vpop.permute.xlu0 %768
  %v772 = vsel %vm56, %v767, 0
  %774 = vmatprep.subr.bf16.mxu0 0
  %775 = vmatpush1.bf16.msra.mxu0 %v769
  %776 = vmatprep.subr.bf16.mxu0 0
  %777 = vmatpush1.bf16.msra.mxu0 0
  %778 = vmatprep.subr.bf16.mxu0 0
  %779 = vmatpush1.bf16.msra.mxu0 0
  %780 = vmatprep.subr.bf16.mxu0 0
  %781 = vmatpush1.bf16.msra.mxu0 0
  %782 = vmatprep.subr.bf16.mxu0 0
  %783 = vmatpush1.bf16.msra.mxu0 0
  %784 = vmatprep.subr.bf16.mxu0 0
  %785 = vmatpush1.bf16.msra.mxu0 0
  %786 = vmatprep.subr.bf16.mxu0 0
  %787 = vmatpush1.bf16.msra.mxu0 0
  %788 = vmatprep.subr.bf16.mxu0 0
  %789 = vmatpush1.bf16.msra.mxu0 0
  %790 = vmatprep.subr.bf16.mxu0 0
  %791 = vmatpush1.bf16.msra.mxu0 0
  %792 = vmatprep.subr.bf16.mxu0 0
  %793 = vmatpush1.bf16.msra.mxu0 0
  %794 = vmatprep.subr.bf16.mxu0 0
  %795 = vmatpush1.bf16.msra.mxu0 0
  %796 = vmatprep.subr.bf16.mxu0 0
  %797 = vmatpush1.bf16.msra.mxu0 0
  %798 = vmatprep.subr.bf16.mxu0 0
  %799 = vmatpush1.bf16.msra.mxu0 0
  %800 = vmatprep.subr.bf16.mxu0 0
  %801 = vmatpush1.bf16.msra.mxu0 0
  %802 = vmatprep.subr.bf16.mxu0 0
  %803 = vmatpush1.bf16.msra.mxu0 0
  %804 = vmatprep.subr.bf16.mxu0 0
  %805 = vmatpush1.bf16.msra.mxu0 0
  %806 = vmatprep.mubr.bf16.mxu0 0
  %807 = vmatmul.mubr.bf16.gmra.mrb[0].mxu0 %v772
  %v808 = vpop.f32.mrb[0].mxu0
  %v809 = vadd.f32 %v757, %v808
  %v810 = vpop.f32.mrb[0].mxu0
  %v811 = vpop.f32.mrb[0].mxu0
  %v812 = vadd.f32 %v760, %v811
  %v813 = vpop.f32.mrb[0].mxu0
  %814 = vdwg.mxu0
  %s815 = scalar_lea.vmem %s1, 96
  %v816 = vld [vmem:[%s815] sm:$0xf]
  %v817 = vld [vmem:[%s815 + $0x4] sm:$0xf]
  %v820 = vunpack.c.l.b16 %v816
  %v821 = vunpack.c.l.b16 %v817
  %v822 = vpack.c.b16 %v821, %v820
  %823 = vrot.lane.b32.xlu0 %v703, 120
  %v824 = vpop.permute.xlu0 %823
  %v827 = vsel %vm56, %v822, 0
  %829 = vmatprep.subr.bf16.mxu0 0
  %830 = vmatpush1.bf16.msra.mxu0 %v824
  %831 = vmatprep.subr.bf16.mxu0 0
  %832 = vmatpush1.bf16.msra.mxu0 0
  %833 = vmatprep.subr.bf16.mxu0 0
  %834 = vmatpush1.bf16.msra.mxu0 0
  %835 = vmatprep.subr.bf16.mxu0 0
  %836 = vmatpush1.bf16.msra.mxu0 0
  %837 = vmatprep.subr.bf16.mxu0 0
  %838 = vmatpush1.bf16.msra.mxu0 0
  %839 = vmatprep.subr.bf16.mxu0 0
  %840 = vmatpush1.bf16.msra.mxu0 0
  %841 = vmatprep.subr.bf16.mxu0 0
  %842 = vmatpush1.bf16.msra.mxu0 0
  %843 = vmatprep.subr.bf16.mxu0 0
  %844 = vmatpush1.bf16.msra.mxu0 0
  %845 = vmatprep.subr.bf16.mxu0 0
  %846 = vmatpush1.bf16.msra.mxu0 0
  %847 = vmatprep.subr.bf16.mxu0 0
  %848 = vmatpush1.bf16.msra.mxu0 0
  %849 = vmatprep.subr.bf16.mxu0 0
  %850 = vmatpush1.bf16.msra.mxu0 0
  %851 = vmatprep.subr.bf16.mxu0 0
  %852 = vmatpush1.bf16.msra.mxu0 0
  %853 = vmatprep.subr.bf16.mxu0 0
  %854 = vmatpush1.bf16.msra.mxu0 0
  %855 = vmatprep.subr.bf16.mxu0 0
  %856 = vmatpush1.bf16.msra.mxu0 0
  %857 = vmatprep.subr.bf16.mxu0 0
  %858 = vmatpush1.bf16.msra.mxu0 0
  %859 = vmatprep.subr.bf16.mxu0 0
  %860 = vmatpush1.bf16.msra.mxu0 0
  %861 = vmatprep.mubr.bf16.mxu0 0
  %862 = vmatmul.mubr.bf16.gmra.mrb[0].mxu0 %v827
  %v863 = vpop.f32.mrb[0].mxu0
  %v864 = vadd.f32 0.0, %v863
  %v865 = vpop.f32.mrb[0].mxu0
  %v866 = vpop.f32.mrb[0].mxu0
  %v867 = vadd.f32 0.0, %v866
  %v868 = vpop.f32.mrb[0].mxu0
  %869 = vdwg.mxu0
  %v870 = vadd.f32 %v809, %v864
  %v871 = vadd.f32 %v812, %v867
  %872 = vset.pattern.permute.xlu0 4
  %873 = vperm.xlu0 %872, %v37
  %v874 = vpop.permute.xlu0 %873
  %876 = vset.pattern.permute.xlu0 4
  %877 = vperm.xlu0 %876, %v38
  %v878 = vpop.permute.xlu0 %877
  %v880 = vadd.f32 %v870, %v874
  %v881 = vadd.f32 %v871, %v878
  %vm882 = vcmp.gt.f32.partialorder %v880, 0.0
  %vm883 = vcmp.gt.f32.partialorder %v881, 0.0
  %v884 = vmul.f32 %v880, 0.01
  %v885 = vmul.f32 %v881, 0.01
  %v886 = vsel %vm882, %v880, %v884
  %v887 = vsel %vm883, %v881, %v885
  %890 = vrot.lane.b32.xlu0 %v502, 120
  %v891 = vpop.permute.xlu0 %890
  %892 = vrot.lane.b32.xlu0 %v503, 120
  %v893 = vpop.permute.xlu0 %892
  %v896 = vadd.f32 %v886, %v891
  %v897 = vadd.f32 %v887, %v893
  %v898 = vmul.f32 %v896, %v33
  %v899 = vmul.f32 %v897, %v33
  %902 = vrot.lane.b32.xlu0 %v898, 8
  %v903 = vpop.permute.xlu0 %902
  %904 = vrot.lane.b32.xlu0 %v899, 8
  %v905 = vpop.permute.xlu0 %904
  %908 = vst.msk [vmem:[#allocation2] sm:$0xff] %vm238, %v903
  %909 = vst.msk [vmem:[#allocation2 + $0x8] sm:$0xff] %vm238, %v905
  %v910 = vld [vmem:[#allocation2] sm:$0xff]
  %v911 = vld [vmem:[#allocation2 + $0x8] sm:$0xff]
  %v912 = vpack.c.bf16 %v911, %v910
  %s913 = scalar_lea.vmem %s1, 104
  %v914 = vld [vmem:[%s913] sm:$0xf]
  %v915 = vld [vmem:[%s913 + $0x4] sm:$0xf]
  %s916 = scalar_lea.vmem %s1, 112
  %v917 = vld [vmem:[%s916] sm:$0xf]
  %v918 = vld [vmem:[%s916 + $0x4] sm:$0xf]
  %v921 = vunpack.c.l.b16 %v917
  %v922 = vunpack.c.l.b16 %v918
  %v923 = vpack.c.b16 %v922, %v921
  %925 = vrot.lane.b32.xlu0 %v912, 124
  %v926 = vpop.permute.xlu0 %925
  %v929 = vsel %vm56, %v923, 0
  %931 = vmatprep.subr.bf16.mxu0 0
  %932 = vmatpush1.bf16.msra.mxu0 %v926
  %933 = vmatprep.subr.bf16.mxu0 0
  %934 = vmatpush1.bf16.msra.mxu0 0
  %935 = vmatprep.subr.bf16.mxu0 0
  %936 = vmatpush1.bf16.msra.mxu0 0
  %937 = vmatprep.subr.bf16.mxu0 0
  %938 = vmatpush1.bf16.msra.mxu0 0
  %939 = vmatprep.subr.bf16.mxu0 0
  %940 = vmatpush1.bf16.msra.mxu0 0
  %941 = vmatprep.subr.bf16.mxu0 0
  %942 = vmatpush1.bf16.msra.mxu0 0
  %943 = vmatprep.subr.bf16.mxu0 0
  %944 = vmatpush1.bf16.msra.mxu0 0
  %945 = vmatprep.subr.bf16.mxu0 0
  %946 = vmatpush1.bf16.msra.mxu0 0
  %947 = vmatprep.subr.bf16.mxu0 0
  %948 = vmatpush1.bf16.msra.mxu0 0
  %949 = vmatprep.subr.bf16.mxu0 0
  %950 = vmatpush1.bf16.msra.mxu0 0
  %951 = vmatprep.subr.bf16.mxu0 0
  %952 = vmatpush1.bf16.msra.mxu0 0
  %953 = vmatprep.subr.bf16.mxu0 0
  %954 = vmatpush1.bf16.msra.mxu0 0
  %955 = vmatprep.subr.bf16.mxu0 0
  %956 = vmatpush1.bf16.msra.mxu0 0
  %957 = vmatprep.subr.bf16.mxu0 0
  %958 = vmatpush1.bf16.msra.mxu0 0
  %959 = vmatprep.subr.bf16.mxu0 0
  %960 = vmatpush1.bf16.msra.mxu0 0
  %961 = vmatprep.subr.bf16.mxu0 0
  %962 = vmatpush1.bf16.msra.mxu0 0
  %963 = vmatprep.mubr.bf16.mxu0 0
  %964 = vmatmul.mubr.bf16.gmra.mrb[0].mxu0 %v929
  %v965 = vpop.f32.mrb[0].mxu0
  %v966 = vadd.f32 0.0, %v965
  %v967 = vpop.f32.mrb[0].mxu0
  %v968 = vpop.f32.mrb[0].mxu0
  %v969 = vadd.f32 0.0, %v968
  %v970 = vpop.f32.mrb[0].mxu0
  %971 = vdwg.mxu0
  %v974 = vunpack.c.l.b16 %v914
  %v975 = vunpack.c.l.b16 %v915
  %v976 = vpack.c.b16 %v975, %v974
  %v978 = vsel %vm56, %v976, 0
  %980 = vmatprep.subr.bf16.mxu0 0
  %981 = vmatpush1.bf16.msra.mxu0 %v912
  %982 = vmatprep.subr.bf16.mxu0 0
  %983 = vmatpush1.bf16.msra.mxu0 0
  %984 = vmatprep.subr.bf16.mxu0 0
  %985 = vmatpush1.bf16.msra.mxu0 0
  %986 = vmatprep.subr.bf16.mxu0 0
  %987 = vmatpush1.bf16.msra.mxu0 0
  %988 = vmatprep.subr.bf16.mxu0 0
  %989 = vmatpush1.bf16.msra.mxu0 0
  %990 = vmatprep.subr.bf16.mxu0 0
  %991 = vmatpush1.bf16.msra.mxu0 0
  %992 = vmatprep.subr.bf16.mxu0 0
  %993 = vmatpush1.bf16.msra.mxu0 0
  %994 = vmatprep.subr.bf16.mxu0 0
  %995 = vmatpush1.bf16.msra.mxu0 0
  %996 = vmatprep.subr.bf16.mxu0 0
  %997 = vmatpush1.bf16.msra.mxu0 0
  %998 = vmatprep.subr.bf16.mxu0 0
  %999 = vmatpush1.bf16.msra.mxu0 0
  %1000 = vmatprep.subr.bf16.mxu0 0
  %1001 = vmatpush1.bf16.msra.mxu0 0
  %1002 = vmatprep.subr.bf16.mxu0 0
  %1003 = vmatpush1.bf16.msra.mxu0 0
  %1004 = vmatprep.subr.bf16.mxu0 0
  %1005 = vmatpush1.bf16.msra.mxu0 0
  %1006 = vmatprep.subr.bf16.mxu0 0
  %1007 = vmatpush1.bf16.msra.mxu0 0
  %1008 = vmatprep.subr.bf16.mxu0 0
  %1009 = vmatpush1.bf16.msra.mxu0 0
  %1010 = vmatprep.subr.bf16.mxu0 0
  %1011 = vmatpush1.bf16.msra.mxu0 0
  %1012 = vmatprep.mubr.bf16.mxu0 0
  %1013 = vmatmul.mubr.bf16.gmra.mrb[0].mxu0 %v978
  %v1014 = vpop.f32.mrb[0].mxu0
  %v1015 = vadd.f32 %v966, %v1014
  %v1016 = vpop.f32.mrb[0].mxu0
  %v1017 = vpop.f32.mrb[0].mxu0
  %v1018 = vadd.f32 %v969, %v1017
  %v1019 = vpop.f32.mrb[0].mxu0
  %1020 = vdwg.mxu0
  %s1021 = scalar_lea.vmem %s1, 120
  %v1022 = vld [vmem:[%s1021] sm:$0xf]
  %v1023 = vld [vmem:[%s1021 + $0x4] sm:$0xf]
  %v1026 = vunpack.c.l.b16 %v1022
  %v1027 = vunpack.c.l.b16 %v1023
  %v1028 = vpack.c.b16 %v1027, %v1026
  %1029 = vrot.lane.b32.xlu0 %v912, 120
  %v1030 = vpop.permute.xlu0 %1029
  %v1033 = vsel %vm56, %v1028, 0
  %1035 = vmatprep.subr.bf16.mxu0 0
  %1036 = vmatpush1.bf16.msra.mxu0 %v1030
  %1037 = vmatprep.subr.bf16.mxu0 0
  %1038 = vmatpush1.bf16.msra.mxu0 0
  %1039 = vmatprep.subr.bf16.mxu0 0
  %1040 = vmatpush1.bf16.msra.mxu0 0
  %1041 = vmatprep.subr.bf16.mxu0 0
  %1042 = vmatpush1.bf16.msra.mxu0 0
  %1043 = vmatprep.subr.bf16.mxu0 0
  %1044 = vmatpush1.bf16.msra.mxu0 0
  %1045 = vmatprep.subr.bf16.mxu0 0
  %1046 = vmatpush1.bf16.msra.mxu0 0
  %1047 = vmatprep.subr.bf16.mxu0 0
  %1048 = vmatpush1.bf16.msra.mxu0 0
  %1049 = vmatprep.subr.bf16.mxu0 0
  %1050 = vmatpush1.bf16.msra.mxu0 0
  %1051 = vmatprep.subr.bf16.mxu0 0
  %1052 = vmatpush1.bf16.msra.mxu0 0
  %1053 = vmatprep.subr.bf16.mxu0 0
  %1054 = vmatpush1.bf16.msra.mxu0 0
  %1055 = vmatprep.subr.bf16.mxu0 0
  %1056 = vmatpush1.bf16.msra.mxu0 0
  %1057 = vmatprep.subr.bf16.mxu0 0
  %1058 = vmatpush1.bf16.msra.mxu0 0
  %1059 = vmatprep.subr.bf16.mxu0 0
  %1060 = vmatpush1.bf16.msra.mxu0 0
  %1061 = vmatprep.subr.bf16.mxu0 0
  %1062 = vmatpush1.bf16.msra.mxu0 0
  %1063 = vmatprep.subr.bf16.mxu0 0
  %1064 = vmatpush1.bf16.msra.mxu0 0
  %1065 = vmatprep.subr.bf16.mxu0 0
  %1066 = vmatpush1.bf16.msra.mxu0 0
  %1067 = vmatprep.mubr.bf16.mxu0 0
  %1068 = vmatmul.mubr.bf16.gmra.mrb[0].mxu0 %v1033
  %v1069 = vpop.f32.mrb[0].mxu0
  %v1070 = vadd.f32 0.0, %v1069
  %v1071 = vpop.f32.mrb[0].mxu0
  %v1072 = vpop.f32.mrb[0].mxu0
  %v1073 = vadd.f32 0.0, %v1072
  %v1074 = vpop.f32.mrb[0].mxu0
  %1075 = vdwg.mxu0
  %v1076 = vadd.f32 %v1015, %v1070
  %v1077 = vadd.f32 %v1018, %v1073
  %1078 = vset.pattern.permute.xlu0 5
  %1079 = vperm.xlu0 %1078, %v37
  %v1080 = vpop.permute.xlu0 %1079
  %1082 = vset.pattern.permute.xlu0 5
  %1083 = vperm.xlu0 %1082, %v38
  %v1084 = vpop.permute.xlu0 %1083
  %v1086 = vadd.f32 %v1076, %v1080
  %v1087 = vadd.f32 %v1077, %v1084
  %vm1088 = vcmp.gt.f32.partialorder %v1086, 0.0
  %vm1089 = vcmp.gt.f32.partialorder %v1087, 0.0
  %v1090 = vmul.f32 %v1086, 0.01
  %v1091 = vmul.f32 %v1087, 0.01
  %v1092 = vsel %vm1088, %v1086, %v1090
  %v1093 = vsel %vm1089, %v1087, %v1091
  %v1094 = vmul.f32 %v1092, %v33
  %v1095 = vmul.f32 %v1093, %v33
  %1098 = vrot.lane.b32.xlu0 %v1094, 8
  %v1099 = vpop.permute.xlu0 %1098
  %1100 = vrot.lane.b32.xlu0 %v1095, 8
  %v1101 = vpop.permute.xlu0 %1100
  %1104 = vst.msk [vmem:[#allocation2] sm:$0xff] %vm238, %v1099
  %1105 = vst.msk [vmem:[#allocation2 + $0x8] sm:$0xff] %vm238, %v1101
  %v1106 = vld [vmem:[#allocation2] sm:$0xff]
  %v1107 = vld [vmem:[#allocation2 + $0x8] sm:$0xff]
  %v1108 = vpack.c.bf16 %v1107, %v1106
  %s1109 = scalar_lea.vmem %s1, 128
  %v1110 = vld [vmem:[%s1109] sm:$0xf]
  %v1111 = vld [vmem:[%s1109 + $0x4] sm:$0xf]
  %s1112 = scalar_lea.vmem %s1, 136
  %v1113 = vld [vmem:[%s1112] sm:$0xf]
  %v1114 = vld [vmem:[%s1112 + $0x4] sm:$0xf]
  %v1117 = vunpack.c.l.b16 %v1113
  %v1118 = vunpack.c.l.b16 %v1114
  %v1119 = vpack.c.b16 %v1118, %v1117
  %1121 = vrot.lane.b32.xlu0 %v1108, 124
  %v1122 = vpop.permute.xlu0 %1121
  %v1125 = vsel %vm56, %v1119, 0
  %1127 = vmatprep.subr.bf16.mxu0 0
  %1128 = vmatpush1.bf16.msra.mxu0 %v1122
  %1129 = vmatprep.subr.bf16.mxu0 0
  %1130 = vmatpush1.bf16.msra.mxu0 0
  %1131 = vmatprep.subr.bf16.mxu0 0
  %1132 = vmatpush1.bf16.msra.mxu0 0
  %1133 = vmatprep.subr.bf16.mxu0 0
  %1134 = vmatpush1.bf16.msra.mxu0 0
  %1135 = vmatprep.subr.bf16.mxu0 0
  %1136 = vmatpush1.bf16.msra.mxu0 0
  %1137 = vmatprep.subr.bf16.mxu0 0
  %1138 = vmatpush1.bf16.msra.mxu0 0
  %1139 = vmatprep.subr.bf16.mxu0 0
  %1140 = vmatpush1.bf16.msra.mxu0 0
  %1141 = vmatprep.subr.bf16.mxu0 0
  %1142 = vmatpush1.bf16.msra.mxu0 0
  %1143 = vmatprep.subr.bf16.mxu0 0
  %1144 = vmatpush1.bf16.msra.mxu0 0
  %1145 = vmatprep.subr.bf16.mxu0 0
  %1146 = vmatpush1.bf16.msra.mxu0 0
  %1147 = vmatprep.subr.bf16.mxu0 0
  %1148 = vmatpush1.bf16.msra.mxu0 0
  %1149 = vmatprep.subr.bf16.mxu0 0
  %1150 = vmatpush1.bf16.msra.mxu0 0
  %1151 = vmatprep.subr.bf16.mxu0 0
  %1152 = vmatpush1.bf16.msra.mxu0 0
  %1153 = vmatprep.subr.bf16.mxu0 0
  %1154 = vmatpush1.bf16.msra.mxu0 0
  %1155 = vmatprep.subr.bf16.mxu0 0
  %1156 = vmatpush1.bf16.msra.mxu0 0
  %1157 = vmatprep.subr.bf16.mxu0 0
  %1158 = vmatpush1.bf16.msra.mxu0 0
  %1159 = vmatprep.mubr.bf16.mxu0 0
  %1160 = vmatmul.mubr.bf16.gmra.mrb[0].mxu0 %v1125
  %v1161 = vpop.f32.mrb[0].mxu0
  %v1162 = vadd.f32 0.0, %v1161
  %v1163 = vpop.f32.mrb[0].mxu0
  %v1164 = vpop.f32.mrb[0].mxu0
  %v1165 = vadd.f32 0.0, %v1164
  %v1166 = vpop.f32.mrb[0].mxu0
  %1167 = vdwg.mxu0
  %v1170 = vunpack.c.l.b16 %v1110
  %v1171 = vunpack.c.l.b16 %v1111
  %v1172 = vpack.c.b16 %v1171, %v1170
  %v1174 = vsel %vm56, %v1172, 0
  %1176 = vmatprep.subr.bf16.mxu0 0
  %1177 = vmatpush1.bf16.msra.mxu0 %v1108
  %1178 = vmatprep.subr.bf16.mxu0 0
  %1179 = vmatpush1.bf16.msra.mxu0 0
  %1180 = vmatprep.subr.bf16.mxu0 0
  %1181 = vmatpush1.bf16.msra.mxu0 0
  %1182 = vmatprep.subr.bf16.mxu0 0
  %1183 = vmatpush1.bf16.msra.mxu0 0
  %1184 = vmatprep.subr.bf16.mxu0 0
  %1185 = vmatpush1.bf16.msra.mxu0 0
  %1186 = vmatprep.subr.bf16.mxu0 0
  %1187 = vmatpush1.bf16.msra.mxu0 0
  %1188 = vmatprep.subr.bf16.mxu0 0
  %1189 = vmatpush1.bf16.msra.mxu0 0
  %1190 = vmatprep.subr.bf16.mxu0 0
  %1191 = vmatpush1.bf16.msra.mxu0 0
  %1192 = vmatprep.subr.bf16.mxu0 0
  %1193 = vmatpush1.bf16.msra.mxu0 0
  %1194 = vmatprep.subr.bf16.mxu0 0
  %1195 = vmatpush1.bf16.msra.mxu0 0
  %1196 = vmatprep.subr.bf16.mxu0 0
  %1197 = vmatpush1.bf16.msra.mxu0 0
  %1198 = vmatprep.subr.bf16.mxu0 0
  %1199 = vmatpush1.bf16.msra.mxu0 0
  %1200 = vmatprep.subr.bf16.mxu0 0
  %1201 = vmatpush1.bf16.msra.mxu0 0
  %1202 = vmatprep.subr.bf16.mxu0 0
  %1203 = vmatpush1.bf16.msra.mxu0 0
  %1204 = vmatprep.subr.bf16.mxu0 0
  %1205 = vmatpush1.bf16.msra.mxu0 0
  %1206 = vmatprep.subr.bf16.mxu0 0
  %1207 = vmatpush1.bf16.msra.mxu0 0
  %1208 = vmatprep.mubr.bf16.mxu0 0
  %1209 = vmatmul.mubr.bf16.gmra.mrb[0].mxu0 %v1174
  %v1210 = vpop.f32.mrb[0].mxu0
  %v1211 = vadd.f32 %v1162, %v1210
  %v1212 = vpop.f32.mrb[0].mxu0
  %v1213 = vpop.f32.mrb[0].mxu0
  %v1214 = vadd.f32 %v1165, %v1213
  %v1215 = vpop.f32.mrb[0].mxu0
  %1216 = vdwg.mxu0
  %s1217 = scalar_lea.vmem %s1, 144
  %v1218 = vld [vmem:[%s1217] sm:$0xf]
  %v1219 = vld [vmem:[%s1217 + $0x4] sm:$0xf]
  %v1222 = vunpack.c.l.b16 %v1218
  %v1223 = vunpack.c.l.b16 %v1219
  %v1224 = vpack.c.b16 %v1223, %v1222
  %1225 = vrot.lane.b32.xlu0 %v1108, 120
  %v1226 = vpop.permute.xlu0 %1225
  %v1229 = vsel %vm56, %v1224, 0
  %1231 = vmatprep.subr.bf16.mxu0 0
  %1232 = vmatpush1.bf16.msra.mxu0 %v1226
  %1233 = vmatprep.subr.bf16.mxu0 0
  %1234 = vmatpush1.bf16.msra.mxu0 0
  %1235 = vmatprep.subr.bf16.mxu0 0
  %1236 = vmatpush1.bf16.msra.mxu0 0
  %1237 = vmatprep.subr.bf16.mxu0 0
  %1238 = vmatpush1.bf16.msra.mxu0 0
  %1239 = vmatprep.subr.bf16.mxu0 0
  %1240 = vmatpush1.bf16.msra.mxu0 0
  %1241 = vmatprep.subr.bf16.mxu0 0
  %1242 = vmatpush1.bf16.msra.mxu0 0
  %1243 = vmatprep.subr.bf16.mxu0 0
  %1244 = vmatpush1.bf16.msra.mxu0 0
  %1245 = vmatprep.subr.bf16.mxu0 0
  %1246 = vmatpush1.bf16.msra.mxu0 0
  %1247 = vmatprep.subr.bf16.mxu0 0
  %1248 = vmatpush1.bf16.msra.mxu0 0
  %1249 = vmatprep.subr.bf16.mxu0 0
  %1250 = vmatpush1.bf16.msra.mxu0 0
  %1251 = vmatprep.subr.bf16.mxu0 0
  %1252 = vmatpush1.bf16.msra.mxu0 0
  %1253 = vmatprep.subr.bf16.mxu0 0
  %1254 = vmatpush1.bf16.msra.mxu0 0
  %1255 = vmatprep.subr.bf16.mxu0 0
  %1256 = vmatpush1.bf16.msra.mxu0 0
  %1257 = vmatprep.subr.bf16.mxu0 0
  %1258 = vmatpush1.bf16.msra.mxu0 0
  %1259 = vmatprep.subr.bf16.mxu0 0
  %1260 = vmatpush1.bf16.msra.mxu0 0
  %1261 = vmatprep.subr.bf16.mxu0 0
  %1262 = vmatpush1.bf16.msra.mxu0 0
  %1263 = vmatprep.mubr.bf16.mxu0 0
  %1264 = vmatmul.mubr.bf16.gmra.mrb[0].mxu0 %v1229
  %v1265 = vpop.f32.mrb[0].mxu0
  %v1266 = vadd.f32 0.0, %v1265
  %v1267 = vpop.f32.mrb[0].mxu0
  %v1268 = vpop.f32.mrb[0].mxu0
  %v1269 = vadd.f32 0.0, %v1268
  %v1270 = vpop.f32.mrb[0].mxu0
  %1271 = vdwg.mxu0
  %v1272 = vadd.f32 %v1211, %v1266
  %v1273 = vadd.f32 %v1214, %v1269
  %1274 = vset.pattern.permute.xlu0 6
  %1275 = vperm.xlu0 %1274, %v37
  %v1276 = vpop.permute.xlu0 %1275
  %1278 = vset.pattern.permute.xlu0 6
  %1279 = vperm.xlu0 %1278, %v38
  %v1280 = vpop.permute.xlu0 %1279
  %v1282 = vadd.f32 %v1272, %v1276
  %v1283 = vadd.f32 %v1273, %v1280
  %vm1284 = vcmp.gt.f32.partialorder %v1282, 0.0
  %vm1285 = vcmp.gt.f32.partialorder %v1283, 0.0
  %v1286 = vmul.f32 %v1282, 0.01
  %v1287 = vmul.f32 %v1283, 0.01
  %v1288 = vsel %vm1284, %v1282, %v1286
  %v1289 = vsel %vm1285, %v1283, %v1287
  %s1290 = scalar_lea.vmem %s1, 152
  %v1291 = vld [vmem:[%s1290] sm:$0xf]
  %v1292 = vld [vmem:[%s1290 + $0x4] sm:$0xf]
  %1293 = vset.pattern.permute.xlu0 7
  %1294 = vperm.xlu0 %1293, %v37
  %v1295 = vpop.permute.xlu0 %1294
  %1297 = vset.pattern.permute.xlu0 7
  %1298 = vperm.xlu0 %1297, %v38
  %v1299 = vpop.permute.xlu0 %1298
  %v1303 = vunpack.c.l.b16 %v1291
  %v1304 = vunpack.c.l.b16 %v1292
  %v1305 = vpack.c.b16 %v1304, %v1303
  %v1307 = vsel %vm56, %v1305, 0
  %1309 = vmatprep.subr.bf16.mxu0 0
  %1310 = vmatpush1.bf16.msra.mxu0 %v1030
  %1311 = vmatprep.subr.bf16.mxu0 0
  %1312 = vmatpush1.bf16.msra.mxu0 0
  %1313 = vmatprep.subr.bf16.mxu0 0
  %1314 = vmatpush1.bf16.msra.mxu0 0
  %1315 = vmatprep.subr.bf16.mxu0 0
  %1316 = vmatpush1.bf16.msra.mxu0 0
  %1317 = vmatprep.subr.bf16.mxu0 0
  %1318 = vmatpush1.bf16.msra.mxu0 0
  %1319 = vmatprep.subr.bf16.mxu0 0
  %1320 = vmatpush1.bf16.msra.mxu0 0
  %1321 = vmatprep.subr.bf16.mxu0 0
  %1322 = vmatpush1.bf16.msra.mxu0 0
  %1323 = vmatprep.subr.bf16.mxu0 0
  %1324 = vmatpush1.bf16.msra.mxu0 0
  %1325 = vmatprep.subr.bf16.mxu0 0
  %1326 = vmatpush1.bf16.msra.mxu0 0
  %1327 = vmatprep.subr.bf16.mxu0 0
  %1328 = vmatpush1.bf16.msra.mxu0 0
  %1329 = vmatprep.subr.bf16.mxu0 0
  %1330 = vmatpush1.bf16.msra.mxu0 0
  %1331 = vmatprep.subr.bf16.mxu0 0
  %1332 = vmatpush1.bf16.msra.mxu0 0
  %1333 = vmatprep.subr.bf16.mxu0 0
  %1334 = vmatpush1.bf16.msra.mxu0 0
  %1335 = vmatprep.subr.bf16.mxu0 0
  %1336 = vmatpush1.bf16.msra.mxu0 0
  %1337 = vmatprep.subr.bf16.mxu0 0
  %1338 = vmatpush1.bf16.msra.mxu0 0
  %1339 = vmatprep.subr.bf16.mxu0 0
  %1340 = vmatpush1.bf16.msra.mxu0 0
  %1341 = vmatprep.mubr.bf16.mxu0 0
  %1342 = vmatmul.mubr.bf16.gmra.mrb[0].mxu0 %v1307
  %v1343 = vpop.f32.mrb[0].mxu0
  %v1344 = vadd.f32 %v1295, %v1343
  %v1345 = vpop.f32.mrb[0].mxu0
  %v1346 = vpop.f32.mrb[0].mxu0
  %v1347 = vadd.f32 %v1299, %v1346
  %v1348 = vpop.f32.mrb[0].mxu0
  %1349 = vdwg.mxu0
  %v1350 = vadd.f32 %v1288, %v1344
  %v1351 = vadd.f32 %v1289, %v1347
  %v1352 = vmul.f32 %v1350, %v33
  %v1353 = vmul.f32 %v1351, %v33
  %vm1354 = vcmask 195648
  %v1355 = vsel %vm1354, %v1352, -inf
  %1356 = vmax.xlane.f32.xlu0 %v1355
  %v1357 = vpop.xlane.xlu0 %1356
  %v1358 = vsel %vm1354, %v1353, -inf
  %1359 = vmax.xlane.f32.xlu0 %v1358
  %v1360 = vpop.xlane.xlu0 %1359
  %vm1361 = vcmp.eq.s32.totalorder %v22, 0
  %v1362 = vsel %vm1361, 1, 0
  %v1363 = vcvt.s32.f32 %v1362
  %v1364 = vmul.f32 %v1357, %v1363
  %v1365 = vmul.f32 %v1360, %v1363
  %v1366 = vadd.f32 %v1364, 0.0
  %v1367 = vadd.f32 %v1365, 0.0
  %vm1368 = vcmask 392448
  %v1369 = vsel %vm1368, %v1352, -inf
  %1370 = vmax.xlane.f32.xlu0 %v1369
  %v1371 = vpop.xlane.xlu0 %1370
  %v1372 = vsel %vm1368, %v1353, -inf
  %1373 = vmax.xlane.f32.xlu0 %v1372
  %v1374 = vpop.xlane.xlu0 %1373
  %vm1375 = vcmp.eq.s32.totalorder %v22, 1
  %v1376 = vsel %vm1375, 1, 0
  %v1377 = vcvt.s32.f32 %v1376
  %v1378 = vmul.f32 %v1371, %v1377
  %v1379 = vmul.f32 %v1374, %v1377
  %v1380 = vadd.f32 %v1366, %v1378
  %v1381 = vadd.f32 %v1367, %v1379
  %v1382 = vld [vmem:[%s4] sm:$0xff]
  %v1383 = vld [vmem:[%s4 + $0x8] sm:$0xff]
  %v1384 = vld [vmem:[%s4 + $0x10] sm:$0xff]
  %v1385 = vld [vmem:[%s4 + $0x18] sm:$0xff]
  %v1386 = vld [vmem:[%s3] sm:$0xf]
  %v1387 = vld [vmem:[%s3 + $0x4] sm:$0xf]
  %v1388 = vld [vmem:[%s3 + $0x8] sm:$0xf]
  %v1389 = vld [vmem:[%s3 + $0xc] sm:$0xf]
  %v1390 = vpack.c.bf16 %v1381, %v1380
  %1392 = vset.pattern.permute.xlu0 0
  %1393 = vperm.xlu0 %1392, %v1382
  %v1394 = vpop.permute.xlu0 %1393
  %1397 = vset.pattern.permute.xlu0 0
  %1398 = vperm.xlu0 %1397, %v1383
  %v1399 = vpop.permute.xlu0 %1398
  %1402 = vset.pattern.permute.xlu0 0
  %1403 = vperm.xlu0 %1402, %v1384
  %v1404 = vpop.permute.xlu0 %1403
  %1407 = vset.pattern.permute.xlu0 0
  %1408 = vperm.xlu0 %1407, %v1385
  %v1409 = vpop.permute.xlu0 %1408
  %v1415 = vunpack.c.l.b16 %v1386
  %v1416 = vunpack.c.l.b16 %v1387
  %v1417 = vunpack.c.l.b16 %v1388
  %v1418 = vunpack.c.l.b16 %v1389
  %v1419 = vpack.c.b16 %v1416, %v1415
  %v1420 = vpack.c.b16 %v1418, %v1417
  %v1422 = vsel %vm56, %v1419, 0
  %v1425 = vsel %vm56, %v1420, 0
  %1427 = vmatprep.subr.bf16.mxu0 0
  %1428 = vmatpush1.bf16.msra.mxu0 %v1390
  %1429 = vmatprep.subr.bf16.mxu0 0
  %1430 = vmatpush1.bf16.msra.mxu0 0
  %1431 = vmatprep.subr.bf16.mxu0 0
  %1432 = vmatpush1.bf16.msra.mxu0 0
  %1433 = vmatprep.subr.bf16.mxu0 0
  %1434 = vmatpush1.bf16.msra.mxu0 0
  %1435 = vmatprep.subr.bf16.mxu0 0
  %1436 = vmatpush1.bf16.msra.mxu0 0
  %1437 = vmatprep.subr.bf16.mxu0 0
  %1438 = vmatpush1.bf16.msra.mxu0 0
  %1439 = vmatprep.subr.bf16.mxu0 0
  %1440 = vmatpush1.bf16.msra.mxu0 0
  %1441 = vmatprep.subr.bf16.mxu0 0
  %1442 = vmatpush1.bf16.msra.mxu0 0
  %1443 = vmatprep.subr.bf16.mxu0 0
  %1444 = vmatpush1.bf16.msra.mxu0 0
  %1445 = vmatprep.subr.bf16.mxu0 0
  %1446 = vmatpush1.bf16.msra.mxu0 0
  %1447 = vmatprep.subr.bf16.mxu0 0
  %1448 = vmatpush1.bf16.msra.mxu0 0
  %1449 = vmatprep.subr.bf16.mxu0 0
  %1450 = vmatpush1.bf16.msra.mxu0 0
  %1451 = vmatprep.subr.bf16.mxu0 0
  %1452 = vmatpush1.bf16.msra.mxu0 0
  %1453 = vmatprep.subr.bf16.mxu0 0
  %1454 = vmatpush1.bf16.msra.mxu0 0
  %1455 = vmatprep.subr.bf16.mxu0 0
  %1456 = vmatpush1.bf16.msra.mxu0 0
  %1457 = vmatprep.subr.bf16.mxu0 0
  %1458 = vmatpush1.bf16.msra.mxu0 0
  %1459 = vmatprep.mubr.bf16.mxu0 0
  %1460 = vmatmul.mubr.bf16.gmra.mrb[0].mxu0 %v1422
  %v1461 = vpop.f32.mrb[0].mxu0
  %v1462 = vadd.f32 %v1394, %v1461
  %v1463 = vpop.f32.mrb[0].mxu0
  %v1464 = vpop.f32.mrb[0].mxu0
  %v1465 = vadd.f32 %v1399, %v1464
  %v1466 = vpop.f32.mrb[0].mxu0
  %1467 = vmatprep.mubr.bf16.mxu0 0
  %1468 = vmatmul.mubr.bf16.gmra.mrb[0].mxu0 %v1425
  %v1469 = vpop.f32.mrb[0].mxu0
  %v1470 = vadd.f32 %v1404, %v1469
  %v1471 = vpop.f32.mrb[0].mxu0
  %v1472 = vpop.f32.mrb[0].mxu0
  %v1473 = vadd.f32 %v1409, %v1472
  %v1474 = vpop.f32.mrb[0].mxu0
  %1475 = vdwg.mxu0
  %s1476 = scalar_lea.vmem %s3, 16
  %v1477 = vld [vmem:[%s1476] sm:$0xf]
  %v1478 = vld [vmem:[%s1476 + $0x4] sm:$0xf]
  %v1479 = vld [vmem:[%s1476 + $0x8] sm:$0xf]
  %v1480 = vld [vmem:[%s1476 + $0xc] sm:$0xf]
  %v1481 = vpack.c.bf16 %v1465, %v1462
  %v1482 = vpack.c.bf16 %v1473, %v1470
  %1483 = vset.pattern.permute.xlu0 1
  %1484 = vperm.xlu0 %1483, %v1382
  %v1485 = vpop.permute.xlu0 %1484
  %1487 = vset.pattern.permute.xlu0 1
  %1488 = vperm.xlu0 %1487, %v1383
  %v1489 = vpop.permute.xlu0 %1488
  %1491 = vset.pattern.permute.xlu0 1
  %1492 = vperm.xlu0 %1491, %v1384
  %v1493 = vpop.permute.xlu0 %1492
  %1495 = vset.pattern.permute.xlu0 1
  %1496 = vperm.xlu0 %1495, %v1385
  %v1497 = vpop.permute.xlu0 %1496
  %v1503 = vunpack.c.l.b16 %v1477
  %v1504 = vunpack.c.l.b16 %v1478
  %v1505 = vunpack.c.l.b16 %v1479
  %v1506 = vunpack.c.l.b16 %v1480
  %v1507 = vpack.c.b16 %v1504, %v1503
  %v1508 = vpack.c.b16 %v1506, %v1505
  %vm1509 = vcmask 261120
  %v1511 = vsel %vm1509, %v1507, 0
  %v1514 = vsel %vm1509, %v1508, 0
  %1516 = vmatprep.subr.bf16.mxu0 0
  %1517 = vmatpush1.bf16.msra.mxu0 %v1481
  %1518 = vmatprep.subr.bf16.mxu0 0
  %1519 = vmatpush1.bf16.msra.mxu0 %v1482
  %1520 = vmatprep.subr.bf16.mxu0 0
  %1521 = vmatpush1.bf16.msra.mxu0 0
  %1522 = vmatprep.subr.bf16.mxu0 0
  %1523 = vmatpush1.bf16.msra.mxu0 0
  %1524 = vmatprep.subr.bf16.mxu0 0
  %1525 = vmatpush1.bf16.msra.mxu0 0
  %1526 = vmatprep.subr.bf16.mxu0 0
  %1527 = vmatpush1.bf16.msra.mxu0 0
  %1528 = vmatprep.subr.bf16.mxu0 0
  %1529 = vmatpush1.bf16.msra.mxu0 0
  %1530 = vmatprep.subr.bf16.mxu0 0
  %1531 = vmatpush1.bf16.msra.mxu0 0
  %1532 = vmatprep.subr.bf16.mxu0 0
  %1533 = vmatpush1.bf16.msra.mxu0 0
  %1534 = vmatprep.subr.bf16.mxu0 0
  %1535 = vmatpush1.bf16.msra.mxu0 0
  %1536 = vmatprep.subr.bf16.mxu0 0
  %1537 = vmatpush1.bf16.msra.mxu0 0
  %1538 = vmatprep.subr.bf16.mxu0 0
  %1539 = vmatpush1.bf16.msra.mxu0 0
  %1540 = vmatprep.subr.bf16.mxu0 0
  %1541 = vmatpush1.bf16.msra.mxu0 0
  %1542 = vmatprep.subr.bf16.mxu0 0
  %1543 = vmatpush1.bf16.msra.mxu0 0
  %1544 = vmatprep.subr.bf16.mxu0 0
  %1545 = vmatpush1.bf16.msra.mxu0 0
  %1546 = vmatprep.subr.bf16.mxu0 0
  %1547 = vmatpush1.bf16.msra.mxu0 0
  %1548 = vmatprep.mubr.bf16.mxu0 0
  %1549 = vmatmul.mubr.bf16.gmra.mrb[0].mxu0 %v1511
  %v1550 = vpop.f32.mrb[0].mxu0
  %v1551 = vadd.f32 %v1485, %v1550
  %v1552 = vpop.f32.mrb[0].mxu0
  %v1553 = vpop.f32.mrb[0].mxu0
  %v1554 = vadd.f32 %v1489, %v1553
  %v1555 = vpop.f32.mrb[0].mxu0
  %1556 = vmatprep.mubr.bf16.mxu0 0
  %1557 = vmatmul.mubr.bf16.gmra.mrb[0].mxu0 %v1514
  %v1558 = vpop.f32.mrb[0].mxu0
  %v1559 = vadd.f32 %v1493, %v1558
  %v1560 = vpop.f32.mrb[0].mxu0
  %v1561 = vpop.f32.mrb[0].mxu0
  %v1562 = vadd.f32 %v1497, %v1561
  %v1563 = vpop.f32.mrb[0].mxu0
  %1564 = vdwg.mxu0
  %v1565 = vmax.f32 %v1551, 0.0
  %v1566 = vmax.f32 %v1554, 0.0
  %v1567 = vmax.f32 %v1559, 0.0
  %v1568 = vmax.f32 %v1562, 0.0
  %s1569 = scalar_lea.vmem %s3, 32
  %v1570 = vld [vmem:[%s1569] sm:$0xf]
  %v1571 = vld [vmem:[%s1569 + $0x4] sm:$0xf]
  %v1572 = vld [vmem:[%s1569 + $0x8] sm:$0xf]
  %v1573 = vld [vmem:[%s1569 + $0xc] sm:$0xf]
  %v1574 = vpack.c.bf16 %v1566, %v1565
  %v1575 = vpack.c.bf16 %v1568, %v1567
  %1576 = vset.pattern.permute.xlu0 2
  %1577 = vperm.xlu0 %1576, %v1382
  %v1578 = vpop.permute.xlu0 %1577
  %1580 = vset.pattern.permute.xlu0 2
  %1581 = vperm.xlu0 %1580, %v1383
  %v1582 = vpop.permute.xlu0 %1581
  %1583 = vset.pattern.permute.xlu0 2
  %1584 = vperm.xlu0 %1583, %v1384
  %v1585 = vpop.permute.xlu0 %1584
  %1586 = vset.pattern.permute.xlu0 2
  %1587 = vperm.xlu0 %1586, %v1385
  %v1588 = vpop.permute.xlu0 %1587
  %v1593 = vunpack.c.l.b16 %v1570
  %v1594 = vunpack.c.l.b16 %v1571
  %v1595 = vunpack.c.l.b16 %v1572
  %v1596 = vunpack.c.l.b16 %v1573
  %v1597 = vpack.c.b16 %v1594, %v1593
  %v1598 = vpack.c.b16 %v1596, %v1595
  %v1600 = vsel %vm1509, %v1597, 0
  %v1603 = vsel %vm1509, %v1598, 0
  %1605 = vmatprep.subr.bf16.mxu0 0
  %1606 = vmatpush1.bf16.msra.mxu0 %v1574
  %1607 = vmatprep.subr.bf16.mxu0 0
  %1608 = vmatpush1.bf16.msra.mxu0 %v1575
  %1609 = vmatprep.subr.bf16.mxu0 0
  %1610 = vmatpush1.bf16.msra.mxu0 0
  %1611 = vmatprep.subr.bf16.mxu0 0
  %1612 = vmatpush1.bf16.msra.mxu0 0
  %1613 = vmatprep.subr.bf16.mxu0 0
  %1614 = vmatpush1.bf16.msra.mxu0 0
  %1615 = vmatprep.subr.bf16.mxu0 0
  %1616 = vmatpush1.bf16.msra.mxu0 0
  %1617 = vmatprep.subr.bf16.mxu0 0
  %1618 = vmatpush1.bf16.msra.mxu0 0
  %1619 = vmatprep.subr.bf16.mxu0 0
  %1620 = vmatpush1.bf16.msra.mxu0 0
  %1621 = vmatprep.subr.bf16.mxu0 0
  %1622 = vmatpush1.bf16.msra.mxu0 0
  %1623 = vmatprep.subr.bf16.mxu0 0
  %1624 = vmatpush1.bf16.msra.mxu0 0
  %1625 = vmatprep.subr.bf16.mxu0 0
  %1626 = vmatpush1.bf16.msra.mxu0 0
  %1627 = vmatprep.subr.bf16.mxu0 0
  %1628 = vmatpush1.bf16.msra.mxu0 0
  %1629 = vmatprep.subr.bf16.mxu0 0
  %1630 = vmatpush1.bf16.msra.mxu0 0
  %1631 = vmatprep.subr.bf16.mxu0 0
  %1632 = vmatpush1.bf16.msra.mxu0 0
  %1633 = vmatprep.subr.bf16.mxu0 0
  %1634 = vmatpush1.bf16.msra.mxu0 0
  %1635 = vmatprep.subr.bf16.mxu0 0
  %1636 = vmatpush1.bf16.msra.mxu0 0
  %1637 = vmatprep.mubr.bf16.mxu0 0
  %1638 = vmatmul.mubr.bf16.gmra.mrb[0].mxu0 %v1600
  %v1639 = vpop.f32.mrb[0].mxu0
  %v1640 = vadd.f32 %v1578, %v1639
  %v1641 = vpop.f32.mrb[0].mxu0
  %v1642 = vpop.f32.mrb[0].mxu0
  %v1643 = vpop.f32.mrb[0].mxu0
  %1644 = vmatprep.mubr.bf16.mxu0 0
  %1645 = vmatmul.mubr.bf16.gmra.mrb[0].mxu0 %v1603
  %v1646 = vpop.f32.mrb[0].mxu0
  %v1647 = vpop.f32.mrb[0].mxu0
  %v1648 = vpop.f32.mrb[0].mxu0
  %v1649 = vpop.f32.mrb[0].mxu0
  %1650 = vdwg.mxu0
  %vm1651 = vcmask 12288
  %1652 = vst.msk [vmem:[%s5] sm:$0x1f] %vm1651, %v1640
  // Predicated region
  $region22: #{tcn_classifier_forward.1} parent=0 // pred_check
    _
  $region23: #{tcn_classifier_forward.1} parent=0 // pred_check_branch
    %1654 = sbr.rel (0) target = $region25
  $region24: #{tcn_classifier_forward.1} parent=0 // pred_region
    _
  $region25: #{tcn_classifier_forward.1} parent=0 // pred_fallthru
    _
  // Predicated region
  $region26: #{tcn_classifier_forward.1} parent=0 // pred_check
    _
  $region27: #{tcn_classifier_forward.1} parent=0 // pred_check_branch
    %1656 = sbr.rel (0) target = $region29
  $region28: #{tcn_classifier_forward.1} parent=0 // pred_region
    _
  $region29: #{tcn_classifier_forward.1} parent=0 // pred_fallthru
    _

</llo_original>
